<compile_context>
chip_gen: v7x
topology: tpu7x:2x2x1
jax: 0.10.0
libtpu: 0.0.40
codegen_flags: <defaults>
</compile_context>

<pallas_src>
import functools

import jax
import jax.numpy as jnp
from jax.experimental import pallas as pl
from jax.experimental.pallas import tpu as pltpu

KSIZE = 5
PAD = KSIZE // 2
LANES = 128


def _gelu(x):
    # TODO(synk): PyTorch nn.GELU defaults to the exact erf form; using the tanh
    # approximation (guaranteed EUP lowering on Mosaic).  Max abs error ~1e-3.
    return jax.nn.gelu(x, approximate=True)


def _stage(hp_ref, h, dw, pw, bias, chain_dtype):
    """Depthwise k=5 (same pad) -> pointwise 1x1 (BN scale pre-folded) -> +bias
    -> GELU -> +residual -> AvgPool1d(2).

    hp_ref: (>= tl + 2*PAD, GB, PC) f32 VMEM scratch (padded depthwise input).
    h     : (tl, GB, PC) stage input, time on the leading (untiled) axis.
    dw    : (KSIZE, PC) lane-tiled depthwise taps.
    pw    : (PC, PC) block-diagonal pointwise weight * folded BN scale.
    bias  : (1, PC) folded BatchNorm bias.
    """
    tl, gb, pc = h.shape
    h32 = h.astype(jnp.float32)

    # Padded depthwise input: interior = h32, 2*PAD halo rows zeroed in place
    # (no concatenate / fresh (tl+4)-row temporary per stage).
    zrow = jnp.zeros((PAD, gb, pc), jnp.float32)
    hp_ref[0:PAD] = zrow
    hp_ref[PAD + tl:PAD + tl + PAD] = zrow
    hp_ref[PAD:PAD + tl] = h32

    # k=5 taps: centre tap straight from the live value (saves one full read
    # pass); the off-centre taps are leading-dim slices of the scratch ref.
    acc = h32 * dw[PAD]
    for k in range(KSIZE):
        if k == PAD:
            continue
        acc = acc + hp_ref[k:k + tl] * dw[k]

    # pointwise conv: one lane-dense MXU matmul, M = tl*gb (gb % 8 == 0 -> free reshape)
    y = jnp.dot(acc.reshape(tl * gb, pc).astype(pw.dtype), pw,
                preferred_element_type=jnp.float32).reshape(tl, gb, pc)
    y = (y + bias).astype(chain_dtype)          # folded BatchNorm bias (scale is in pw)
    y = _gelu(y) + h.astype(chain_dtype)        # DropPath(0.0) == identity
    # AvgPool1d(kernel=2, stride=2) over time: pair adjacent leading rows, in registers
    y = y.reshape(tl // 2, 2, gb, pc)
    return (y[:, 0] + y[:, 1]) * 0.5


def conv_header_kernel(x_ref, dw1_ref, pw1_ref, b1_ref,
                       dw2_ref, pw2_ref, b2_ref, o_ref, hp_ref, *, chain_dtype):
    x = x_ref[...]                                                                 # (T, GB, PC)
    h = _stage(hp_ref, x, dw1_ref[...], pw1_ref[...], b1_ref[...], chain_dtype)    # (T//2, GB, PC)
    h = _stage(hp_ref, h, dw2_ref[...], pw2_ref[...], b2_ref[...], chain_dtype)    # (T//4, GB, PC)
    o_ref[...] = h.astype(o_ref.dtype)


def _pick_gb(T, PC, g_total, *, target_bytes=1 << 20):
    """Groups per grid step: ~1 MiB x blocks, multiple of 8, >= 2 grid steps if possible."""
    per_group = T * PC * 4
    gb = max(8, (target_bytes // per_group) // 8 * 8)
    gb = min(gb, -(-g_total // 8) * 8)            # never exceed total (rounded-up) groups
    if g_total >= 16:                             # leave >= 2 steps for v7x's second TensorCore
        gb = min(gb, max(8, (g_total // 2) // 8 * 8))
    return int(gb)


def _vmem_limit_bytes():
    cap = 128 << 20
    try:
        cap = int(getattr(pltpu.get_tpu_info(), "vmem_capacity_bytes", cap))
    except Exception:
        pass
    # ~90 MiB on v5e/v6e (128 MiB physical), ~45 MiB on v7x (64 MiB physical)
    limit = min(cap * 7 // 10, cap - (16 << 20))
    return int(max(limit, 32 << 20))


def conv_header_forward(x_tnc, t_length, params, *,
                        matmul_dtype=jnp.float32, chain_dtype=jnp.float32):
    """x_tnc: (T, N, C), t_length: (N,) int32 -> ((T//4, N, C), t_length // 4).

    params = (dw1, pw1, sb1, dw2, pw2, sb2) with:
      dw: (KSIZE, C)  == torch depthwise Conv1d weight (C, 1, K):  w[:, 0, :].T
      pw: (Cin, Cout) == torch pointwise Conv1d weight (Cout, Cin, 1): w[:, :, 0].T
      sb: (2, C)      == folded eval-mode BatchNorm [scale; bias]

    matmul_dtype=bf16: MXU-native on v5e/v6e/v7x (f32 matmuls run multi-pass).
    chain_dtype=bf16 : post-matmul elementwise chain in bf16 (v6e/v7x only; keep
                       f32 on v5e, which has no bf16 VALU).
    """
    dw1, pw1, sb1, dw2, pw2, sb2 = params
    T, N, C = x_tnc.shape
    neck, cout = pw1.shape[1], pw2.shape[1]
    assert T % 4 == 0, "two AvgPool1d(2) stages require T % 4 == 0"
    assert neck == C and cout == neck, "residual adds require in == neck == out channels"

    # lane packing: P batch elements share the 128-lane axis (free reshape in HBM)
    # TODO(synk): for C that doesn't divide 128 (P == 1, PC < 128) pad channels up
    # to a divisor of 128 so stores stay lane-dense.
    P = LANES // C if (C < LANES and LANES % C == 0) else 1
    PC = P * C
    g_total = -(-N // P)                      # number of lane-packed groups
    GB = _pick_gb(T, PC, g_total)             # groups per grid step (auto-sized)
    g_pad = -(-g_total // GB) * GB
    n_pad = g_pad * P

    x = x_tnc                                  # keep caller dtype; upcast in-kernel
    if n_pad != N:
        # TODO(synk): a masked tail block would avoid this full-array HBM pad pass.
        x = jnp.pad(x, ((0, 0), (0, n_pad - N), (0, 0)))
    xp = x.reshape(T, g_pad, PC)               # free: N and C are contiguous

    def lane_tile(a):                          # per-channel params, repeated per packed element
        return jnp.tile(a, (1, P)) if P > 1 else a

    def lane_blockdiag(w):                     # keep packed batch elements independent in the matmul
        return jnp.kron(jnp.eye(P, dtype=w.dtype), w) if P > 1 else w

    dw1p, dw2p = lane_tile(dw1), lane_tile(dw2)
    # fold BN scale into the pointwise weights; the kernel only adds the bias
    pw1p = lane_blockdiag(pw1 * sb1[0][None, :]).astype(matmul_dtype)
    pw2p = lane_blockdiag(pw2 * sb2[0][None, :]).astype(matmul_dtype)
    b1p = lane_tile(sb1[1:2])
    b2p = lane_tile(sb2[1:2])

    T4 = T // 4
    grid = (g_pad // GB,)
    kernel = functools.partial(conv_header_kernel, chain_dtype=chain_dtype)

    out = pl.pallas_call(
        kernel,
        out_shape=jax.ShapeDtypeStruct((T4, g_pad, PC), x_tnc.dtype),
        grid_spec=pltpu.PrefetchScalarGridSpec(
            num_scalar_prefetch=0,
            grid=grid,
            in_specs=[
                pl.BlockSpec((T, GB, PC), lambda g: (0, g, 0)),
                pl.BlockSpec((KSIZE, PC), lambda g: (0, 0)),
                pl.BlockSpec((PC, PC), lambda g: (0, 0)),
                pl.BlockSpec((1, PC), lambda g: (0, 0)),
                pl.BlockSpec((KSIZE, PC), lambda g: (0, 0)),
                pl.BlockSpec((PC, PC), lambda g: (0, 0)),
                pl.BlockSpec((1, PC), lambda g: (0, 0)),
            ],
            out_specs=pl.BlockSpec((T4, GB, PC), lambda g: (0, g, 0)),
            scratch_shapes=[pltpu.VMEM((T + 2 * PAD, GB, PC), jnp.float32)],
        ),
        compiler_params=pltpu.CompilerParams(
            dimension_semantics=("parallel",),
            vmem_limit_bytes=_vmem_limit_bytes(),
        ),
    )(xp, dw1p, pw1p, b1p, dw2p, pw2p, b2p)
    # TODO(synk): for very long T (esp. v7x's 64 MiB VMEM) additionally tile T with a
    # per-stage 2*PAD-row halo; current blocks hold the full T extent.

    y = out.reshape(T4, n_pad, C)              # free metadata reshape
    if n_pad != N:
        y = y[:, :N, :]                        # drop batch padding only when present
    return y, t_length // 4


def _reference(x_tnc, params):
    """Pure-JAX reference of the same forward pass (unpacked layout, unfolded BN scale)."""
    dw1, pw1, sb1, dw2, pw2, sb2 = params
    x = x_tnc.astype(jnp.float32)              # (T, N, C)

    def stage(h, dw, pw, sb):
        T = h.shape[0]
        hp = jnp.pad(h, ((PAD, PAD), (0, 0), (0, 0)))
        acc = sum(hp[k:k + T] * dw[k] for k in range(KSIZE))
        y = jnp.einsum('tnc,cd->tnd', acc, pw)
        y = y * sb[0] + sb[1]
        y = _gelu(y) + h
        return (y[0::2] + y[1::2]) * 0.5

    h = stage(x, dw1, pw1, sb1)
    h = stage(h, dw2, pw2, sb2)
    return h                                   # (T//4, N, C)


def _fold_bn(gamma, beta, rmean, rvar, eps=1e-5):
    scale = gamma / jnp.sqrt(rvar + eps)
    bias = beta - rmean * scale
    return jnp.stack([scale, bias], axis=0).astype(jnp.float32)   # (2, C)


if __name__ == "__main__":
    # Small shapes: T=16, in_channels = neck_channels = out_channels = 32
    # (the module's residual `conv(x) + x` requires matching channel counts).
    T, C = 16, 32
    key = jax.random.PRNGKey(0)
    ks = jax.random.split(key, 12)

    dw1 = jax.random.normal(ks[1], (KSIZE, C), jnp.float32) * 0.2
    pw1 = jax.random.normal(ks[2], (C, C), jnp.float32) * 0.1
    sb1 = _fold_bn(1.0 + 0.1 * jax.random.normal(ks[3], (C,)),
                   0.1 * jax.random.normal(ks[4], (C,)),
                   0.1 * jax.random.normal(ks[5], (C,)),
                   1.0 + 0.1 * jax.random.uniform(ks[6], (C,)))
    dw2 = jax.random.normal(ks[7], (KSIZE, C), jnp.float32) * 0.2
    pw2 = jax.random.normal(ks[8], (C, C), jnp.float32) * 0.1
    sb2 = _fold_bn(1.0 + 0.1 * jax.random.normal(ks[9], (C,)),
                   0.1 * jax.random.normal(ks[10], (C,)),
                   0.1 * jax.random.normal(ks[11], (C,)),
                   jnp.ones((C,), jnp.float32))
    params = (dw1, pw1, sb1, dw2, pw2, sb2)

    # case 1: N=32  -> single grid step (8 packed groups), f32, tight check
    # case 2: N=6   -> ragged batch (padding path), f32, tight check
    # case 3: N=80  -> multi-step grid (>=2 parallel steps / GB cap path), f32, tight check
    # case 4: N=32  -> bf16 MXU + bf16 post-matmul chain (v6e/v7x fast path), loose check
    cases = ((32, jnp.float32, jnp.float32, 5e-4),
             (6,  jnp.float32, jnp.float32, 5e-4),
             (80, jnp.float32, jnp.float32, 5e-4),
             (32, jnp.bfloat16, jnp.bfloat16, 5e-2))
    for n, mdt, cdt, tol in cases:
        x = jax.random.normal(ks[0], (T, n, C), jnp.float32)
        t_length = jnp.full((n,), T, dtype=jnp.int32)
        y, t_out = conv_header_forward(x, t_length, params,
                                       matmul_dtype=mdt, chain_dtype=cdt)
        y = jax.block_until_ready(y)
        y_ref = _reference(x, params)
        assert y.shape == (T // 4, n, C), y.shape
        assert jnp.all(t_out == t_length // 4)
        err = float(jnp.max(jnp.abs(y - y_ref)))
        assert jnp.allclose(y, y_ref, rtol=tol, atol=tol), (n, str(mdt), str(cdt), err)

    print("KERNEL_OK")
</pallas_src>

<mosaic_0001>
module attributes {stable_mosaic.version = 11 : i64} {
  func.func @conv_header_kernel(%arg0: i32, %arg1: memref<16x8x128xf32, #tpu.memory_space<vmem>>, %arg2: memref<5x128xf32, #tpu.memory_space<vmem>>, %arg3: memref<128x128xf32, #tpu.memory_space<vmem>>, %arg4: memref<1x128xf32, #tpu.memory_space<vmem>>, %arg5: memref<5x128xf32, #tpu.memory_space<vmem>>, %arg6: memref<128x128xf32, #tpu.memory_space<vmem>>, %arg7: memref<1x128xf32, #tpu.memory_space<vmem>>, %arg8: memref<4x8x128xf32, #tpu.memory_space<vmem>>, %arg9: memref<20x8x128xf32, #tpu.memory_space<vmem>>) attributes {dimension_semantics = [#tpu.dimension_semantics<parallel>], iteration_bounds = array<i64: 1>, scalar_prefetch = 0 : i64, scratch_operands = 1 : i64, tpu.core_type = #tpu.core_type<tc>, window_params = [{transform_indices = @transform_0, window_bounds = array<i64: 16, 8, 128>}, {pipeline_mode = #tpu.pipeline_mode<synchronous>, transform_indices = @transform_1, window_bounds = array<i64: 5, 128>}, {pipeline_mode = #tpu.pipeline_mode<synchronous>, transform_indices = @transform_2, window_bounds = array<i64: 128, 128>}, {pipeline_mode = #tpu.pipeline_mode<synchronous>, transform_indices = @transform_3, window_bounds = array<i64: 1, 128>}, {pipeline_mode = #tpu.pipeline_mode<synchronous>, transform_indices = @transform_4, window_bounds = array<i64: 5, 128>}, {pipeline_mode = #tpu.pipeline_mode<synchronous>, transform_indices = @transform_5, window_bounds = array<i64: 128, 128>}, {pipeline_mode = #tpu.pipeline_mode<synchronous>, transform_indices = @transform_6, window_bounds = array<i64: 1, 128>}, {transform_indices = @transform_7, window_bounds = array<i64: 4, 8, 128>}]} {
    %c0 = arith.constant 0 : index
    %c0_0 = arith.constant 0 : index
    %c0_1 = arith.constant 0 : index
    %0 = vector.load %arg1[%c0, %c0_0, %c0_1] : memref<16x8x128xf32, #tpu.memory_space<vmem>>, vector<16x8x128xf32>
    %c0_2 = arith.constant 0 : index
    %c0_3 = arith.constant 0 : index
    %1 = vector.load %arg2[%c0_2, %c0_3] : memref<5x128xf32, #tpu.memory_space<vmem>>, vector<5x128xf32>
    %c0_4 = arith.constant 0 : index
    %c0_5 = arith.constant 0 : index
    %2 = vector.load %arg3[%c0_4, %c0_5] : memref<128x128xf32, #tpu.memory_space<vmem>>, vector<128x128xf32>
    %c0_6 = arith.constant 0 : index
    %c0_7 = arith.constant 0 : index
    %3 = vector.load %arg4[%c0_6, %c0_7] : memref<1x128xf32, #tpu.memory_space<vmem>>, vector<1x128xf32>
    %cst = arith.constant 0.000000e+00 : f32
    %4 = vector.broadcast %cst : f32 to vector<2x8x128xf32>
    %c0_8 = arith.constant 0 : index
    %c0_9 = arith.constant 0 : index
    %c0_10 = arith.constant 0 : index
    %5 = vector.load %arg9[%c0_8, %c0_9, %c0_10] : memref<20x8x128xf32, #tpu.memory_space<vmem>>, vector<2x8x128xf32>
    tpu.vector_store %arg9[%c0_8, %c0_9, %c0_10], %4 {strides = array<i32>} : memref<20x8x128xf32, #tpu.memory_space<vmem>>, vector<2x8x128xf32>,
    %c18 = arith.constant 18 : index
    %c0_11 = arith.constant 0 : index
    %c0_12 = arith.constant 0 : index
    %6 = vector.load %arg9[%c18, %c0_11, %c0_12] : memref<20x8x128xf32, #tpu.memory_space<vmem>>, vector<2x8x128xf32>
    tpu.vector_store %arg9[%c18, %c0_11, %c0_12], %4 {strides = array<i32>} : memref<20x8x128xf32, #tpu.memory_space<vmem>>, vector<2x8x128xf32>,
    %c2 = arith.constant 2 : index
    %c0_13 = arith.constant 0 : index
    %c0_14 = arith.constant 0 : index
    %7 = vector.load %arg9[%c2, %c0_13, %c0_14] : memref<20x8x128xf32, #tpu.memory_space<vmem>>, vector<16x8x128xf32>
    tpu.vector_store %arg9[%c2, %c0_13, %c0_14], %0 {strides = array<i32>} : memref<20x8x128xf32, #tpu.memory_space<vmem>>, vector<16x8x128xf32>,
    %8 = vector.extract_strided_slice %1 {offsets = [2, 0], sizes = [1, 128], strides = [1, 1]} : vector<5x128xf32> to vector<1x128xf32>
    %9 = vector.shape_cast %8 : vector<1x128xf32> to vector<128xf32>
    %10 = vector.shape_cast %9 : vector<128xf32> to vector<1x1x128xf32>
    %11 = vector.broadcast %10 : vector<1x1x128xf32> to vector<16x8x128xf32>
    %12 = arith.mulf %0, %11 : vector<16x8x128xf32>
    %c0_15 = arith.constant 0 : index
    %c0_16 = arith.constant 0 : index
    %c0_17 = arith.constant 0 : index
    %13 = vector.load %arg9[%c0_15, %c0_16, %c0_17] : memref<20x8x128xf32, #tpu.memory_space<vmem>>, vector<16x8x128xf32>
    %14 = vector.extract_strided_slice %1 {offsets = [0, 0], sizes = [1, 128], strides = [1, 1]} : vector<5x128xf32> to vector<1x128xf32>
    %15 = vector.shape_cast %14 : vector<1x128xf32> to vector<128xf32>
    %16 = vector.shape_cast %15 : vector<128xf32> to vector<1x1x128xf32>
    %17 = vector.broadcast %16 : vector<1x1x128xf32> to vector<16x8x128xf32>
    %18 = arith.mulf %13, %17 : vector<16x8x128xf32>
    %19 = arith.addf %12, %18 : vector<16x8x128xf32>
    %c1 = arith.constant 1 : index
    %c0_18 = arith.constant 0 : index
    %c0_19 = arith.constant 0 : index
    %20 = vector.load %arg9[%c1, %c0_18, %c0_19] : memref<20x8x128xf32, #tpu.memory_space<vmem>>, vector<16x8x128xf32>
    %21 = vector.extract_strided_slice %1 {offsets = [1, 0], sizes = [1, 128], strides = [1, 1]} : vector<5x128xf32> to vector<1x128xf32>
    %22 = vector.shape_cast %21 : vector<1x128xf32> to vector<128xf32>
    %23 = vector.shape_cast %22 : vector<128xf32> to vector<1x1x128xf32>
    %24 = vector.broadcast %23 : vector<1x1x128xf32> to vector<16x8x128xf32>
    %25 = arith.mulf %20, %24 : vector<16x8x128xf32>
    %26 = arith.addf %19, %25 : vector<16x8x128xf32>
    %c3 = arith.constant 3 : index
    %c0_20 = arith.constant 0 : index
    %c0_21 = arith.constant 0 : index
    %27 = vector.load %arg9[%c3, %c0_20, %c0_21] : memref<20x8x128xf32, #tpu.memory_space<vmem>>, vector<16x8x128xf32>
    %28 = vector.extract_strided_slice %1 {offsets = [3, 0], sizes = [1, 128], strides = [1, 1]} : vector<5x128xf32> to vector<1x128xf32>
    %29 = vector.shape_cast %28 : vector<1x128xf32> to vector<128xf32>
    %30 = vector.shape_cast %29 : vector<128xf32> to vector<1x1x128xf32>
    %31 = vector.broadcast %30 : vector<1x1x128xf32> to vector<16x8x128xf32>
    %32 = arith.mulf %27, %31 : vector<16x8x128xf32>
    %33 = arith.addf %26, %32 : vector<16x8x128xf32>
    %c4 = arith.constant 4 : index
    %c0_22 = arith.constant 0 : index
    %c0_23 = arith.constant 0 : index
    %34 = vector.load %arg9[%c4, %c0_22, %c0_23] : memref<20x8x128xf32, #tpu.memory_space<vmem>>, vector<16x8x128xf32>
    %35 = vector.extract_strided_slice %1 {offsets = [4, 0], sizes = [1, 128], strides = [1, 1]} : vector<5x128xf32> to vector<1x128xf32>
    %36 = vector.shape_cast %35 : vector<1x128xf32> to vector<128xf32>
    %37 = vector.shape_cast %36 : vector<128xf32> to vector<1x1x128xf32>
    %38 = vector.broadcast %37 : vector<1x1x128xf32> to vector<16x8x128xf32>
    %39 = arith.mulf %34, %38 : vector<16x8x128xf32>
    %40 = arith.addf %33, %39 : vector<16x8x128xf32>
    %41 = vector.shape_cast %40 : vector<16x8x128xf32> to vector<128x128xf32>
    %cst_24 = arith.constant dense<0.000000e+00> : vector<128x128xf32>
    %42 = tpu.matmul %41, %2, %cst_24 {dimension_numbers = #tpu.dot_dimension_numbers<[1], [0], [0], [1], [0, 0, 1, 1], [], []>} : vector<128x128xf32>, vector<128x128xf32>, vector<128x128xf32> -> vector<128x128xf32>
    %43 = vector.shape_cast %42 : vector<128x128xf32> to vector<16x8x128xf32>
    %44 = vector.shape_cast %3 : vector<1x128xf32> to vector<1x1x128xf32>
    %45 = vector.broadcast %44 : vector<1x1x128xf32> to vector<16x8x128xf32>
    %46 = arith.addf %43, %45 : vector<16x8x128xf32>
    %47 = arith.mulf %46, %46 : vector<16x8x128xf32>
    %48 = arith.mulf %46, %47 : vector<16x8x128xf32>
    %cst_25 = arith.constant 4.471500e-02 : f32
    %49 = vector.broadcast %cst_25 : f32 to vector<16x8x128xf32>
    %50 = arith.mulf %49, %48 : vector<16x8x128xf32>
    %51 = arith.addf %46, %50 : vector<16x8x128xf32>
    %cst_26 = arith.constant 0.797884583 : f32
    %52 = vector.broadcast %cst_26 : f32 to vector<16x8x128xf32>
    %53 = arith.mulf %52, %51 : vector<16x8x128xf32>
    %54 = math.tanh %53 : vector<16x8x128xf32>
    %cst_27 = arith.constant 1.000000e+00 : f32
    %55 = vector.broadcast %cst_27 : f32 to vector<16x8x128xf32>
    %56 = arith.addf %55, %54 : vector<16x8x128xf32>
    %cst_28 = arith.constant 5.000000e-01 : f32
    %57 = vector.broadcast %cst_28 : f32 to vector<16x8x128xf32>
    %58 = arith.mulf %57, %56 : vector<16x8x128xf32>
    %59 = arith.mulf %46, %58 : vector<16x8x128xf32>
    %60 = arith.addf %59, %0 : vector<16x8x128xf32>
    %61 = vector.shape_cast %60 : vector<16x8x128xf32> to vector<8x2x8x128xf32>
    %62 = vector.extract_strided_slice %61 {offsets = [0, 0, 0, 0], sizes = [8, 1, 8, 128], strides = [1, 1, 1, 1]} : vector<8x2x8x128xf32> to vector<8x1x8x128xf32>
    %63 = vector.shape_cast %62 : vector<8x1x8x128xf32> to vector<8x8x128xf32>
    %64 = vector.extract_strided_slice %61 {offsets = [0, 1, 0, 0], sizes = [8, 1, 8, 128], strides = [1, 1, 1, 1]} : vector<8x2x8x128xf32> to vector<8x1x8x128xf32>
    %65 = vector.shape_cast %64 : vector<8x1x8x128xf32> to vector<8x8x128xf32>
    %66 = arith.addf %63, %65 : vector<8x8x128xf32>
    %cst_29 = arith.constant 5.000000e-01 : f32
    %67 = vector.broadcast %cst_29 : f32 to vector<8x8x128xf32>
    %68 = arith.mulf %66, %67 : vector<8x8x128xf32>
    %c0_30 = arith.constant 0 : index
    %c0_31 = arith.constant 0 : index
    %69 = vector.load %arg5[%c0_30, %c0_31] : memref<5x128xf32, #tpu.memory_space<vmem>>, vector<5x128xf32>
    %c0_32 = arith.constant 0 : index
    %c0_33 = arith.constant 0 : index
    %70 = vector.load %arg6[%c0_32, %c0_33] : memref<128x128xf32, #tpu.memory_space<vmem>>, vector<128x128xf32>
    %c0_34 = arith.constant 0 : index
    %c0_35 = arith.constant 0 : index
    %71 = vector.load %arg7[%c0_34, %c0_35] : memref<1x128xf32, #tpu.memory_space<vmem>>, vector<1x128xf32>
    %cst_36 = arith.constant 0.000000e+00 : f32
    %72 = vector.broadcast %cst_36 : f32 to vector<2x8x128xf32>
    %c0_37 = arith.constant 0 : index
    %c0_38 = arith.constant 0 : index
    %c0_39 = arith.constant 0 : index
    %73 = vector.load %arg9[%c0_37, %c0_38, %c0_39] : memref<20x8x128xf32, #tpu.memory_space<vmem>>, vector<2x8x128xf32>
    tpu.vector_store %arg9[%c0_37, %c0_38, %c0_39], %72 {strides = array<i32>} : memref<20x8x128xf32, #tpu.memory_space<vmem>>, vector<2x8x128xf32>,
    %c10 = arith.constant 10 : index
    %c0_40 = arith.constant 0 : index
    %c0_41 = arith.constant 0 : index
    %74 = vector.load %arg9[%c10, %c0_40, %c0_41] : memref<20x8x128xf32, #tpu.memory_space<vmem>>, vector<2x8x128xf32>
    tpu.vector_store %arg9[%c10, %c0_40, %c0_41], %72 {strides = array<i32>} : memref<20x8x128xf32, #tpu.memory_space<vmem>>, vector<2x8x128xf32>,
    %c2_42 = arith.constant 2 : index
    %c0_43 = arith.constant 0 : index
    %c0_44 = arith.constant 0 : index
    %75 = vector.load %arg9[%c2_42, %c0_43, %c0_44] : memref<20x8x128xf32, #tpu.memory_space<vmem>>, vector<8x8x128xf32>
    tpu.vector_store %arg9[%c2_42, %c0_43, %c0_44], %68 {strides = array<i32>} : memref<20x8x128xf32, #tpu.memory_space<vmem>>, vector<8x8x128xf32>,
    %76 = vector.extract_strided_slice %69 {offsets = [2, 0], sizes = [1, 128], strides = [1, 1]} : vector<5x128xf32> to vector<1x128xf32>
    %77 = vector.shape_cast %76 : vector<1x128xf32> to vector<128xf32>
    %78 = vector.shape_cast %77 : vector<128xf32> to vector<1x1x128xf32>
    %79 = vector.broadcast %78 : vector<1x1x128xf32> to vector<8x8x128xf32>
    %80 = arith.mulf %68, %79 : vector<8x8x128xf32>
    %c0_45 = arith.constant 0 : index
    %c0_46 = arith.constant 0 : index
    %c0_47 = arith.constant 0 : index
    %81 = vector.load %arg9[%c0_45, %c0_46, %c0_47] : memref<20x8x128xf32, #tpu.memory_space<vmem>>, vector<8x8x128xf32>
    %82 = vector.extract_strided_slice %69 {offsets = [0, 0], sizes = [1, 128], strides = [1, 1]} : vector<5x128xf32> to vector<1x128xf32>
    %83 = vector.shape_cast %82 : vector<1x128xf32> to vector<128xf32>
    %84 = vector.shape_cast %83 : vector<128xf32> to vector<1x1x128xf32>
    %85 = vector.broadcast %84 : vector<1x1x128xf32> to vector<8x8x128xf32>
    %86 = arith.mulf %81, %85 : vector<8x8x128xf32>
    %87 = arith.addf %80, %86 : vector<8x8x128xf32>
    %c1_48 = arith.constant 1 : index
    %c0_49 = arith.constant 0 : index
    %c0_50 = arith.constant 0 : index
    %88 = vector.load %arg9[%c1_48, %c0_49, %c0_50] : memref<20x8x128xf32, #tpu.memory_space<vmem>>, vector<8x8x128xf32>
    %89 = vector.extract_strided_slice %69 {offsets = [1, 0], sizes = [1, 128], strides = [1, 1]} : vector<5x128xf32> to vector<1x128xf32>
    %90 = vector.shape_cast %89 : vector<1x128xf32> to vector<128xf32>
    %91 = vector.shape_cast %90 : vector<128xf32> to vector<1x1x128xf32>
    %92 = vector.broadcast %91 : vector<1x1x128xf32> to vector<8x8x128xf32>
    %93 = arith.mulf %88, %92 : vector<8x8x128xf32>
    %94 = arith.addf %87, %93 : vector<8x8x128xf32>
    %c3_51 = arith.constant 3 : index
    %c0_52 = arith.constant 0 : index
    %c0_53 = arith.constant 0 : index
    %95 = vector.load %arg9[%c3_51, %c0_52, %c0_53] : memref<20x8x128xf32, #tpu.memory_space<vmem>>, vector<8x8x128xf32>
    %96 = vector.extract_strided_slice %69 {offsets = [3, 0], sizes = [1, 128], strides = [1, 1]} : vector<5x128xf32> to vector<1x128xf32>
    %97 = vector.shape_cast %96 : vector<1x128xf32> to vector<128xf32>
    %98 = vector.shape_cast %97 : vector<128xf32> to vector<1x1x128xf32>
    %99 = vector.broadcast %98 : vector<1x1x128xf32> to vector<8x8x128xf32>
    %100 = arith.mulf %95, %99 : vector<8x8x128xf32>
    %101 = arith.addf %94, %100 : vector<8x8x128xf32>
    %c4_54 = arith.constant 4 : index
    %c0_55 = arith.constant 0 : index
    %c0_56 = arith.constant 0 : index
    %102 = vector.load %arg9[%c4_54, %c0_55, %c0_56] : memref<20x8x128xf32, #tpu.memory_space<vmem>>, vector<8x8x128xf32>
    %103 = vector.extract_strided_slice %69 {offsets = [4, 0], sizes = [1, 128], strides = [1, 1]} : vector<5x128xf32> to vector<1x128xf32>
    %104 = vector.shape_cast %103 : vector<1x128xf32> to vector<128xf32>
    %105 = vector.shape_cast %104 : vector<128xf32> to vector<1x1x128xf32>
    %106 = vector.broadcast %105 : vector<1x1x128xf32> to vector<8x8x128xf32>
    %107 = arith.mulf %102, %106 : vector<8x8x128xf32>
    %108 = arith.addf %101, %107 : vector<8x8x128xf32>
    %109 = vector.shape_cast %108 : vector<8x8x128xf32> to vector<64x128xf32>
    %cst_57 = arith.constant dense<0.000000e+00> : vector<64x128xf32>
    %110 = tpu.matmul %109, %70, %cst_57 {dimension_numbers = #tpu.dot_dimension_numbers<[1], [0], [0], [1], [0, 0, 1, 1], [], []>} : vector<64x128xf32>, vector<128x128xf32>, vector<64x128xf32> -> vector<64x128xf32>
    %111 = vector.shape_cast %110 : vector<64x128xf32> to vector<8x8x128xf32>
    %112 = vector.shape_cast %71 : vector<1x128xf32> to vector<1x1x128xf32>
    %113 = vector.broadcast %112 : vector<1x1x128xf32> to vector<8x8x128xf32>
    %114 = arith.addf %111, %113 : vector<8x8x128xf32>
    %115 = arith.mulf %114, %114 : vector<8x8x128xf32>
    %116 = arith.mulf %114, %115 : vector<8x8x128xf32>
    %cst_58 = arith.constant 4.471500e-02 : f32
    %117 = vector.broadcast %cst_58 : f32 to vector<8x8x128xf32>
    %118 = arith.mulf %117, %116 : vector<8x8x128xf32>
    %119 = arith.addf %114, %118 : vector<8x8x128xf32>
    %cst_59 = arith.constant 0.797884583 : f32
    %120 = vector.broadcast %cst_59 : f32 to vector<8x8x128xf32>
    %121 = arith.mulf %120, %119 : vector<8x8x128xf32>
    %122 = math.tanh %121 : vector<8x8x128xf32>
    %cst_60 = arith.constant 1.000000e+00 : f32
    %123 = vector.broadcast %cst_60 : f32 to vector<8x8x128xf32>
    %124 = arith.addf %123, %122 : vector<8x8x128xf32>
    %cst_61 = arith.constant 5.000000e-01 : f32
    %125 = vector.broadcast %cst_61 : f32 to vector<8x8x128xf32>
    %126 = arith.mulf %125, %124 : vector<8x8x128xf32>
    %127 = arith.mulf %114, %126 : vector<8x8x128xf32>
    %128 = arith.addf %127, %68 : vector<8x8x128xf32>
    %129 = vector.shape_cast %128 : vector<8x8x128xf32> to vector<4x2x8x128xf32>
    %130 = vector.extract_strided_slice %129 {offsets = [0, 0, 0, 0], sizes = [4, 1, 8, 128], strides = [1, 1, 1, 1]} : vector<4x2x8x128xf32> to vector<4x1x8x128xf32>
    %131 = vector.shape_cast %130 : vector<4x1x8x128xf32> to vector<4x8x128xf32>
    %132 = vector.extract_strided_slice %129 {offsets = [0, 1, 0, 0], sizes = [4, 1, 8, 128], strides = [1, 1, 1, 1]} : vector<4x2x8x128xf32> to vector<4x1x8x128xf32>
    %133 = vector.shape_cast %132 : vector<4x1x8x128xf32> to vector<4x8x128xf32>
    %134 = arith.addf %131, %133 : vector<4x8x128xf32>
    %cst_62 = arith.constant 5.000000e-01 : f32
    %135 = vector.broadcast %cst_62 : f32 to vector<4x8x128xf32>
    %136 = arith.mulf %134, %135 : vector<4x8x128xf32>
    %c0_63 = arith.constant 0 : index
    %c0_64 = arith.constant 0 : index
    %c0_65 = arith.constant 0 : index
    %137 = vector.load %arg8[%c0_63, %c0_64, %c0_65] : memref<4x8x128xf32, #tpu.memory_space<vmem>>, vector<4x8x128xf32>
    tpu.vector_store %arg8[%c0_63, %c0_64, %c0_65], %136 {strides = array<i32>} : memref<4x8x128xf32, #tpu.memory_space<vmem>>, vector<4x8x128xf32>,
    return
  }
  func.func @transform_0(%arg0: i32) -> (i32, i32, i32) {
    %c0_i32 = arith.constant 0 : i32
    %c0_i32_0 = arith.constant 0 : i32
    %c0_i32_1 = arith.constant 0 : i32
    return %c0_i32, %arg0, %c0_i32_0 : i32, i32, i32
  }
  func.func @transform_1(%arg0: i32) -> (i32, i32) {
    %c0_i32 = arith.constant 0 : i32
    %c0_i32_0 = arith.constant 0 : i32
    %c0_i32_1 = arith.constant 0 : i32
    return %c0_i32, %c0_i32_0 : i32, i32
  }
  func.func @transform_2(%arg0: i32) -> (i32, i32) {
    %c0_i32 = arith.constant 0 : i32
    %c0_i32_0 = arith.constant 0 : i32
    %c0_i32_1 = arith.constant 0 : i32
    return %c0_i32, %c0_i32_0 : i32, i32
  }
  func.func @transform_3(%arg0: i32) -> (i32, i32) {
    %c0_i32 = arith.constant 0 : i32
    %c0_i32_0 = arith.constant 0 : i32
    %c0_i32_1 = arith.constant 0 : i32
    return %c0_i32, %c0_i32_0 : i32, i32
  }
  func.func @transform_4(%arg0: i32) -> (i32, i32) {
    %c0_i32 = arith.constant 0 : i32
    %c0_i32_0 = arith.constant 0 : i32
    %c0_i32_1 = arith.constant 0 : i32
    return %c0_i32, %c0_i32_0 : i32, i32
  }
  func.func @transform_5(%arg0: i32) -> (i32, i32) {
    %c0_i32 = arith.constant 0 : i32
    %c0_i32_0 = arith.constant 0 : i32
    %c0_i32_1 = arith.constant 0 : i32
    return %c0_i32, %c0_i32_0 : i32, i32
  }
  func.func @transform_6(%arg0: i32) -> (i32, i32) {
    %c0_i32 = arith.constant 0 : i32
    %c0_i32_0 = arith.constant 0 : i32
    %c0_i32_1 = arith.constant 0 : i32
    return %c0_i32, %c0_i32_0 : i32, i32
  }
  func.func @transform_7(%arg0: i32) -> (i32, i32, i32) {
    %c0_i32 = arith.constant 0 : i32
    %c0_i32_0 = arith.constant 0 : i32
    %c0_i32_1 = arith.constant 0 : i32
    return %c0_i32, %arg0, %c0_i32_0 : i32, i32, i32
  }
}

</mosaic_0001>

<llo_original>
// kernel: tpu_custom_call.1
$region0: #{tpu_custom_call.1}
  #allocation0 [shape = 'u32[]', space=smem, size = 0x4, offset = 0x4, fixed_abs, tag = 'smem constant byte address 0x4 - core index']
  #allocation1 [shape = 'u32[144,128]{1,0:T(1,128)}', space=vmem, size = 0x12000, scoped, tag = 'internal scratch']
  #allocation2 [shape = 'f32[20,8,128]{2,1,0:T(8,128)}', space=vmem, size = 0x14000, scoped, tag = 'scratch operand']
  %s0 = inlined_call_operand.hbm [shape: f32[16,8,128], index: 0, kind: input, shape index: {}]
  %s1 = inlined_call_operand.hbm [shape: f32[5,128], index: 1, kind: input, shape index: {}]
  %s2 = inlined_call_operand.hbm [shape: f32[128,128], index: 2, kind: input, shape index: {}]
  %s3 = inlined_call_operand.hbm [shape: f32[1,128], index: 3, kind: input, shape index: {}]
  %s4 = inlined_call_operand.hbm [shape: f32[5,128], index: 4, kind: input, shape index: {}]
  %s5 = inlined_call_operand.hbm [shape: f32[128,128], index: 5, kind: input, shape index: {}]
  %s6 = inlined_call_operand.hbm [shape: f32[1,128], index: 6, kind: input, shape index: {}]
  %s7 = inlined_call_operand.hbm [shape: f32[4,8,128], index: 7, kind: output, shape index: {}]
  %s8 = sld [smem:[#allocation0]]
  $region66: #{tpu_custom_call.1} parent=0
    _
  %s10 = ssub.s32 1, %s8
  %s11 = scalar_select 0, %s10, %s8
  $region1: #{tpu_custom_call.1} parent=0
    #allocation3 [shape = 'u8[65536]{0}', space=vmem, size = 0x10000, scoped, tag = 'input window, operand 0, single buffered']
    #allocation4 [shape = 's32[1]{0}', space=sflag, size = 0x4, scoped, tag = 'scoped memory for tpu_custom_call.1']
    #allocation5 [shape = 's32[1]{0}', space=sflag, size = 0x4, scoped, tag = 'scoped memory for tpu_custom_call.1']
    #allocation6 [shape = 'u8[4096]{0}', space=vmem, size = 0x1000, scoped, tag = 'input window, operand 1, single buffered']
    #allocation7 [shape = 's32[1]{0}', space=sflag, size = 0x4, scoped, tag = 'scoped memory for tpu_custom_call.1']
    #allocation8 [shape = 'u8[65536]{0}', space=vmem, size = 0x10000, scoped, tag = 'input window, operand 2, single buffered']
    #allocation9 [shape = 'u8[512]{0}', space=vmem, size = 0x400, scoped, tag = 'input window, operand 3, single buffered']
    #allocation10 [shape = 's32[1]{0}', space=sflag, size = 0x4, scoped, tag = 'scoped memory for tpu_custom_call.1']
    #allocation11 [shape = 'u8[4096]{0}', space=vmem, size = 0x1000, scoped, tag = 'input window, operand 4, single buffered']
    #allocation12 [shape = 'u8[65536]{0}', space=vmem, size = 0x10000, scoped, tag = 'input window, operand 5, single buffered']
    #allocation13 [shape = 's32[1]{0}', space=sflag, size = 0x4, scoped, tag = 'scoped memory for tpu_custom_call.1']
    #allocation14 [shape = 'u8[512]{0}', space=vmem, size = 0x400, scoped, tag = 'input window, operand 6, single buffered']
    #allocation15 [shape = 'u8[16384]{0}', space=vmem, size = 0x4000, scoped, tag = 'output window, operand 0, single buffered']
    %12 = vsyncpa [#allocation4], 0
    %13 = vsyncpa [#allocation7], 0
    %14 = vsyncpa [#allocation10], 0
    %15 = vsyncpa [#allocation13], 0
    %16 = vsyncpa [#allocation5], 0
    // Predicated region
    $region2: #{tpu_custom_call.1} parent=1 // pred_check
      _
    $region3: #{tpu_custom_call.1} parent=1 // pred_check_branch
      %18 = sbr.rel (0) target = $region5
    $region4: #{tpu_custom_call.1} parent=1 // pred_region
      %s20 = ssub.s32 2048, 2048
      %21 = vsyncadd [#allocation4], %s20
      %s22 = sshll.u32 [#allocation3], 4
      %s23 = int_to_ptr.vmem [resolvable:$true] %s22
      %28 = dma.hbm_to_vmem [thread:$0]  %s0, 2048, %s23, [#allocation4], 128, 128, 8
    $region5: #{tpu_custom_call.1} parent=1 // pred_fallthru
      _
    // Predicated region
    $region6: #{tpu_custom_call.1} parent=1 // pred_check
      _
    $region7: #{tpu_custom_call.1} parent=1 // pred_check_branch
      %30 = sbr.rel (0) target = $region9
    $region8: #{tpu_custom_call.1} parent=1 // pred_region
      %s32 = ssub.s32 128, 128
      %33 = vsyncadd [#allocation7], %s32
      %s35 = sshll.u32 [#allocation6], 4
      %s36 = int_to_ptr.vmem [resolvable:$true] %s35
      %38 = dma.hbm_to_vmem [thread:$0]  %s1, 128, %s36, [#allocation7]
    $region9: #{tpu_custom_call.1} parent=1 // pred_fallthru
      _
    // Predicated region
    $region10: #{tpu_custom_call.1} parent=1 // pred_check
      _
    $region11: #{tpu_custom_call.1} parent=1 // pred_check_branch
      %40 = sbr.rel (0) target = $region13
    $region12: #{tpu_custom_call.1} parent=1 // pred_region
      %s42 = ssub.s32 2048, 2048
      %43 = vsyncadd [#allocation7], %s42
      %s44 = sshll.u32 [#allocation8], 4
      %s45 = int_to_ptr.vmem [resolvable:$true] %s44
      %50 = dma.hbm_to_vmem [thread:$0]  %s2, 2048, %s45, [#allocation7], 128, 128, 8
    $region13: #{tpu_custom_call.1} parent=1 // pred_fallthru
      _
    // Predicated region
    $region14: #{tpu_custom_call.1} parent=1 // pred_check
      _
    $region15: #{tpu_custom_call.1} parent=1 // pred_check_branch
      %52 = sbr.rel (0) target = $region17
    $region16: #{tpu_custom_call.1} parent=1 // pred_region
      %s54 = ssub.s32 16, 16
      %55 = vsyncadd [#allocation10], %s54
      %s57 = sshll.u32 [#allocation9], 4
      %s58 = int_to_ptr.vmem [resolvable:$true] %s57
      %60 = dma.hbm_to_vmem [thread:$0]  %s3, 16, %s58, [#allocation10]
    $region17: #{tpu_custom_call.1} parent=1 // pred_fallthru
      _
    // Predicated region
    $region18: #{tpu_custom_call.1} parent=1 // pred_check
      _
    $region19: #{tpu_custom_call.1} parent=1 // pred_check_branch
      %62 = sbr.rel (0) target = $region21
    $region20: #{tpu_custom_call.1} parent=1 // pred_region
      %s64 = ssub.s32 128, 128
      %65 = vsyncadd [#allocation10], %s64
      %s67 = sshll.u32 [#allocation11], 4
      %s68 = int_to_ptr.vmem [resolvable:$true] %s67
      %70 = dma.hbm_to_vmem [thread:$0]  %s4, 128, %s68, [#allocation10]
    $region21: #{tpu_custom_call.1} parent=1 // pred_fallthru
      _
    // Predicated region
    $region22: #{tpu_custom_call.1} parent=1 // pred_check
      _
    $region23: #{tpu_custom_call.1} parent=1 // pred_check_branch
      %72 = sbr.rel (0) target = $region25
    $region24: #{tpu_custom_call.1} parent=1 // pred_region
      %s74 = ssub.s32 2048, 2048
      %75 = vsyncadd [#allocation13], %s74
      %s76 = sshll.u32 [#allocation12], 4
      %s77 = int_to_ptr.vmem [resolvable:$true] %s76
      %82 = dma.hbm_to_vmem [thread:$0]  %s5, 2048, %s77, [#allocation13], 128, 128, 8
    $region25: #{tpu_custom_call.1} parent=1 // pred_fallthru
      _
    // Predicated region
    $region26: #{tpu_custom_call.1} parent=1 // pred_check
      _
    $region27: #{tpu_custom_call.1} parent=1 // pred_check_branch
      %84 = sbr.rel (0) target = $region29
    $region28: #{tpu_custom_call.1} parent=1 // pred_region
      %s86 = ssub.s32 16, 16
      %87 = vsyncadd [#allocation13], %s86
      %s89 = sshll.u32 [#allocation14], 4
      %s90 = int_to_ptr.vmem [resolvable:$true] %s89
      %92 = dma.hbm_to_vmem [thread:$0]  %s6, 16, %s90, [#allocation13]
    $region29: #{tpu_custom_call.1} parent=1 // pred_fallthru
      _
    // Predicated region
    $region30: #{tpu_custom_call.1} parent=1 // pred_check
      _
    $region31: #{tpu_custom_call.1} parent=1 // pred_check_branch
      %94 = sbr.rel (0) target = $region33
    $region32: #{tpu_custom_call.1} parent=1 // pred_region
      %95 = dma.done [#allocation4], 2048
    $region33: #{tpu_custom_call.1} parent=1 // pred_fallthru
      _
    // Predicated region
    $region34: #{tpu_custom_call.1} parent=1 // pred_check
      _
    $region35: #{tpu_custom_call.1} parent=1 // pred_check_branch
      %97 = sbr.rel (0) target = $region37
    $region36: #{tpu_custom_call.1} parent=1 // pred_region
      %98 = dma.done [#allocation7], 128
    $region37: #{tpu_custom_call.1} parent=1 // pred_fallthru
      _
    // Predicated region
    $region38: #{tpu_custom_call.1} parent=1 // pred_check
      _
    $region39: #{tpu_custom_call.1} parent=1 // pred_check_branch
      %100 = sbr.rel (0) target = $region41
    $region40: #{tpu_custom_call.1} parent=1 // pred_region
      %101 = dma.done [#allocation7], 2048
    $region41: #{tpu_custom_call.1} parent=1 // pred_fallthru
      _
    // Predicated region
    $region42: #{tpu_custom_call.1} parent=1 // pred_check
      _
    $region43: #{tpu_custom_call.1} parent=1 // pred_check_branch
      %103 = sbr.rel (0) target = $region45
    $region44: #{tpu_custom_call.1} parent=1 // pred_region
      %104 = dma.done [#allocation10], 16
    $region45: #{tpu_custom_call.1} parent=1 // pred_fallthru
      _
    // Predicated region
    $region46: #{tpu_custom_call.1} parent=1 // pred_check
      _
    $region47: #{tpu_custom_call.1} parent=1 // pred_check_branch
      %106 = sbr.rel (0) target = $region49
    $region48: #{tpu_custom_call.1} parent=1 // pred_region
      %107 = dma.done [#allocation10], 128
    $region49: #{tpu_custom_call.1} parent=1 // pred_fallthru
      _
    // Predicated region
    $region50: #{tpu_custom_call.1} parent=1 // pred_check
      _
    $region51: #{tpu_custom_call.1} parent=1 // pred_check_branch
      %109 = sbr.rel (0) target = $region53
    $region52: #{tpu_custom_call.1} parent=1 // pred_region
      %110 = dma.done [#allocation13], 2048
    $region53: #{tpu_custom_call.1} parent=1 // pred_fallthru
      _
    // Predicated region
    $region54: #{tpu_custom_call.1} parent=1 // pred_check
      _
    $region55: #{tpu_custom_call.1} parent=1 // pred_check_branch
      %112 = sbr.rel (0) target = $region57
    $region56: #{tpu_custom_call.1} parent=1 // pred_region
      %113 = dma.done [#allocation13], 16
    $region57: #{tpu_custom_call.1} parent=1 // pred_fallthru
      _
    %v114 = vld [vmem:[#allocation3] sm:$0xff]
    %v115 = vld [vmem:[#allocation3 + $0x8] sm:$0xff]
    %v116 = vld [vmem:[#allocation3 + $0x10] sm:$0xff]
    %v117 = vld [vmem:[#allocation3 + $0x18] sm:$0xff]
    %v118 = vld [vmem:[#allocation3 + $0x20] sm:$0xff]
    %v119 = vld [vmem:[#allocation3 + $0x28] sm:$0xff]
    %v120 = vld [vmem:[#allocation3 + $0x30] sm:$0xff]
    %v121 = vld [vmem:[#allocation3 + $0x38] sm:$0xff]
    %v122 = vld [vmem:[#allocation3 + $0x40] sm:$0xff]
    %v123 = vld [vmem:[#allocation3 + $0x48] sm:$0xff]
    %v124 = vld [vmem:[#allocation3 + $0x50] sm:$0xff]
    %v125 = vld [vmem:[#allocation3 + $0x58] sm:$0xff]
    %v126 = vld [vmem:[#allocation3 + $0x60] sm:$0xff]
    %v127 = vld [vmem:[#allocation3 + $0x68] sm:$0xff]
    %v128 = vld [vmem:[#allocation3 + $0x70] sm:$0xff]
    %v129 = vld [vmem:[#allocation3 + $0x78] sm:$0xff]
    %v130 = vld [vmem:[#allocation6] sm:$0x1f]
    %v131 = vld [vmem:[#allocation8] sm:$0xff]
    %v132 = vld [vmem:[#allocation8 + $0x8] sm:$0xff]
    %v133 = vld [vmem:[#allocation8 + $0x10] sm:$0xff]
    %v134 = vld [vmem:[#allocation8 + $0x18] sm:$0xff]
    %v135 = vld [vmem:[#allocation8 + $0x20] sm:$0xff]
    %v136 = vld [vmem:[#allocation8 + $0x28] sm:$0xff]
    %v137 = vld [vmem:[#allocation8 + $0x30] sm:$0xff]
    %v138 = vld [vmem:[#allocation8 + $0x38] sm:$0xff]
    %v139 = vld [vmem:[#allocation8 + $0x40] sm:$0xff]
    %v140 = vld [vmem:[#allocation8 + $0x48] sm:$0xff]
    %v141 = vld [vmem:[#allocation8 + $0x50] sm:$0xff]
    %v142 = vld [vmem:[#allocation8 + $0x58] sm:$0xff]
    %v143 = vld [vmem:[#allocation8 + $0x60] sm:$0xff]
    %v144 = vld [vmem:[#allocation8 + $0x68] sm:$0xff]
    %v145 = vld [vmem:[#allocation8 + $0x70] sm:$0xff]
    %v146 = vld [vmem:[#allocation8 + $0x78] sm:$0xff]
    %v147 = vld [vmem:[#allocation9] sm:$0x1]
    %148 = vst [vmem:[#allocation2] sm:$0xff] 0.0
    %149 = vst [vmem:[#allocation2 + $0x8] sm:$0xff] 0.0
    %s150 = scalar_lea.vmem [#allocation2], 144
    %151 = vst [vmem:[%s150] sm:$0xff] 0.0
    %152 = vst [vmem:[%s150 + $0x8] sm:$0xff] 0.0
    %s153 = scalar_lea.vmem [#allocation2], 16
    %154 = vst [vmem:[%s153] sm:$0xff] %v114
    %155 = vst [vmem:[%s153 + $0x8] sm:$0xff] %v115
    %156 = vst [vmem:[%s153 + $0x10] sm:$0xff] %v116
    %157 = vst [vmem:[%s153 + $0x18] sm:$0xff] %v117
    %158 = vst [vmem:[%s153 + $0x20] sm:$0xff] %v118
    %159 = vst [vmem:[%s153 + $0x28] sm:$0xff] %v119
    %160 = vst [vmem:[%s153 + $0x30] sm:$0xff] %v120
    %161 = vst [vmem:[%s153 + $0x38] sm:$0xff] %v121
    %162 = vst [vmem:[%s153 + $0x40] sm:$0xff] %v122
    %163 = vst [vmem:[%s153 + $0x48] sm:$0xff] %v123
    %164 = vst [vmem:[%s153 + $0x50] sm:$0xff] %v124
    %165 = vst [vmem:[%s153 + $0x58] sm:$0xff] %v125
    %166 = vst [vmem:[%s153 + $0x60] sm:$0xff] %v126
    %167 = vst [vmem:[%s153 + $0x68] sm:$0xff] %v127
    %168 = vst [vmem:[%s153 + $0x70] sm:$0xff] %v128
    %169 = vst [vmem:[%s153 + $0x78] sm:$0xff] %v129
    %v170 = vlaneseq
    %v171 = vshrl.u32 %v170, 7
    %v172 = vsub.s32 2, %v171
    %v173 = vrot.slane %v130, %v172
    %v174 = vmul.f32 %v114, %v173
    %v175 = vmul.f32 %v115, %v173
    %v176 = vmul.f32 %v116, %v173
    %v177 = vmul.f32 %v117, %v173
    %v178 = vmul.f32 %v118, %v173
    %v179 = vmul.f32 %v119, %v173
    %v180 = vmul.f32 %v120, %v173
    %v181 = vmul.f32 %v121, %v173
    %v182 = vmul.f32 %v122, %v173
    %v183 = vmul.f32 %v123, %v173
    %v184 = vmul.f32 %v124, %v173
    %v185 = vmul.f32 %v125, %v173
    %v186 = vmul.f32 %v126, %v173
    %v187 = vmul.f32 %v127, %v173
    %v188 = vmul.f32 %v128, %v173
    %v189 = vmul.f32 %v129, %v173
    %v190 = vld [vmem:[#allocation2] sm:$0xff]
    %v191 = vld [vmem:[#allocation2 + $0x8] sm:$0xff]
    %v192 = vld [vmem:[#allocation2 + $0x10] sm:$0xff]
    %v193 = vld [vmem:[#allocation2 + $0x18] sm:$0xff]
    %v194 = vld [vmem:[#allocation2 + $0x20] sm:$0xff]
    %v195 = vld [vmem:[#allocation2 + $0x28] sm:$0xff]
    %v196 = vld [vmem:[#allocation2 + $0x30] sm:$0xff]
    %v197 = vld [vmem:[#allocation2 + $0x38] sm:$0xff]
    %v198 = vld [vmem:[#allocation2 + $0x40] sm:$0xff]
    %v199 = vld [vmem:[#allocation2 + $0x48] sm:$0xff]
    %v200 = vld [vmem:[#allocation2 + $0x50] sm:$0xff]
    %v201 = vld [vmem:[#allocation2 + $0x58] sm:$0xff]
    %v202 = vld [vmem:[#allocation2 + $0x60] sm:$0xff]
    %v203 = vld [vmem:[#allocation2 + $0x68] sm:$0xff]
    %v204 = vld [vmem:[#allocation2 + $0x70] sm:$0xff]
    %v205 = vld [vmem:[#allocation2 + $0x78] sm:$0xff]
    %v206 = vlaneseq
    %v207 = vshrl.u32 %v206, 7
    %v208 = vsub.s32 0, %v207
    %v209 = vrot.slane %v130, %v208
    %v210 = vmul.f32 %v190, %v209
    %v211 = vmul.f32 %v191, %v209
    %v212 = vmul.f32 %v192, %v209
    %v213 = vmul.f32 %v193, %v209
    %v214 = vmul.f32 %v194, %v209
    %v215 = vmul.f32 %v195, %v209
    %v216 = vmul.f32 %v196, %v209
    %v217 = vmul.f32 %v197, %v209
    %v218 = vmul.f32 %v198, %v209
    %v219 = vmul.f32 %v199, %v209
    %v220 = vmul.f32 %v200, %v209
    %v221 = vmul.f32 %v201, %v209
    %v222 = vmul.f32 %v202, %v209
    %v223 = vmul.f32 %v203, %v209
    %v224 = vmul.f32 %v204, %v209
    %v225 = vmul.f32 %v205, %v209
    %v226 = vadd.f32 %v174, %v210
    %v227 = vadd.f32 %v175, %v211
    %v228 = vadd.f32 %v176, %v212
    %v229 = vadd.f32 %v177, %v213
    %v230 = vadd.f32 %v178, %v214
    %v231 = vadd.f32 %v179, %v215
    %v232 = vadd.f32 %v180, %v216
    %v233 = vadd.f32 %v181, %v217
    %v234 = vadd.f32 %v182, %v218
    %v235 = vadd.f32 %v183, %v219
    %v236 = vadd.f32 %v184, %v220
    %v237 = vadd.f32 %v185, %v221
    %v238 = vadd.f32 %v186, %v222
    %v239 = vadd.f32 %v187, %v223
    %v240 = vadd.f32 %v188, %v224
    %v241 = vadd.f32 %v189, %v225
    %s242 = scalar_lea.vmem [#allocation2], 8
    %v243 = vld [vmem:[%s242] sm:$0xff]
    %v244 = vld [vmem:[%s242 + $0x8] sm:$0xff]
    %v245 = vld [vmem:[%s242 + $0x10] sm:$0xff]
    %v246 = vld [vmem:[%s242 + $0x18] sm:$0xff]
    %v247 = vld [vmem:[%s242 + $0x20] sm:$0xff]
    %v248 = vld [vmem:[%s242 + $0x28] sm:$0xff]
    %v249 = vld [vmem:[%s242 + $0x30] sm:$0xff]
    %v250 = vld [vmem:[%s242 + $0x38] sm:$0xff]
    %v251 = vld [vmem:[%s242 + $0x40] sm:$0xff]
    %v252 = vld [vmem:[%s242 + $0x48] sm:$0xff]
    %v253 = vld [vmem:[%s242 + $0x50] sm:$0xff]
    %v254 = vld [vmem:[%s242 + $0x58] sm:$0xff]
    %v255 = vld [vmem:[%s242 + $0x60] sm:$0xff]
    %v256 = vld [vmem:[%s242 + $0x68] sm:$0xff]
    %v257 = vld [vmem:[%s242 + $0x70] sm:$0xff]
    %v258 = vld [vmem:[%s242 + $0x78] sm:$0xff]
    %v259 = vlaneseq
    %v260 = vshrl.u32 %v259, 7
    %v261 = vsub.s32 1, %v260
    %v262 = vrot.slane %v130, %v261
    %v263 = vmul.f32 %v243, %v262
    %v264 = vmul.f32 %v244, %v262
    %v265 = vmul.f32 %v245, %v262
    %v266 = vmul.f32 %v246, %v262
    %v267 = vmul.f32 %v247, %v262
    %v268 = vmul.f32 %v248, %v262
    %v269 = vmul.f32 %v249, %v262
    %v270 = vmul.f32 %v250, %v262
    %v271 = vmul.f32 %v251, %v262
    %v272 = vmul.f32 %v252, %v262
    %v273 = vmul.f32 %v253, %v262
    %v274 = vmul.f32 %v254, %v262
    %v275 = vmul.f32 %v255, %v262
    %v276 = vmul.f32 %v256, %v262
    %v277 = vmul.f32 %v257, %v262
    %v278 = vmul.f32 %v258, %v262
    %v279 = vadd.f32 %v226, %v263
    %v280 = vadd.f32 %v227, %v264
    %v281 = vadd.f32 %v228, %v265
    %v282 = vadd.f32 %v229, %v266
    %v283 = vadd.f32 %v230, %v267
    %v284 = vadd.f32 %v231, %v268
    %v285 = vadd.f32 %v232, %v269
    %v286 = vadd.f32 %v233, %v270
    %v287 = vadd.f32 %v234, %v271
    %v288 = vadd.f32 %v235, %v272
    %v289 = vadd.f32 %v236, %v273
    %v290 = vadd.f32 %v237, %v274
    %v291 = vadd.f32 %v238, %v275
    %v292 = vadd.f32 %v239, %v276
    %v293 = vadd.f32 %v240, %v277
    %v294 = vadd.f32 %v241, %v278
    %s295 = scalar_lea.vmem [#allocation2], 24
    %v296 = vld [vmem:[%s295] sm:$0xff]
    %v297 = vld [vmem:[%s295 + $0x8] sm:$0xff]
    %v298 = vld [vmem:[%s295 + $0x10] sm:$0xff]
    %v299 = vld [vmem:[%s295 + $0x18] sm:$0xff]
    %v300 = vld [vmem:[%s295 + $0x20] sm:$0xff]
    %v301 = vld [vmem:[%s295 + $0x28] sm:$0xff]
    %v302 = vld [vmem:[%s295 + $0x30] sm:$0xff]
    %v303 = vld [vmem:[%s295 + $0x38] sm:$0xff]
    %v304 = vld [vmem:[%s295 + $0x40] sm:$0xff]
    %v305 = vld [vmem:[%s295 + $0x48] sm:$0xff]
    %v306 = vld [vmem:[%s295 + $0x50] sm:$0xff]
    %v307 = vld [vmem:[%s295 + $0x58] sm:$0xff]
    %v308 = vld [vmem:[%s295 + $0x60] sm:$0xff]
    %v309 = vld [vmem:[%s295 + $0x68] sm:$0xff]
    %v310 = vld [vmem:[%s295 + $0x70] sm:$0xff]
    %v311 = vld [vmem:[%s295 + $0x78] sm:$0xff]
    %v312 = vlaneseq
    %v313 = vshrl.u32 %v312, 7
    %v314 = vsub.s32 3, %v313
    %v315 = vrot.slane %v130, %v314
    %v316 = vmul.f32 %v296, %v315
    %v317 = vmul.f32 %v297, %v315
    %v318 = vmul.f32 %v298, %v315
    %v319 = vmul.f32 %v299, %v315
    %v320 = vmul.f32 %v300, %v315
    %v321 = vmul.f32 %v301, %v315
    %v322 = vmul.f32 %v302, %v315
    %v323 = vmul.f32 %v303, %v315
    %v324 = vmul.f32 %v304, %v315
    %v325 = vmul.f32 %v305, %v315
    %v326 = vmul.f32 %v306, %v315
    %v327 = vmul.f32 %v307, %v315
    %v328 = vmul.f32 %v308, %v315
    %v329 = vmul.f32 %v309, %v315
    %v330 = vmul.f32 %v310, %v315
    %v331 = vmul.f32 %v311, %v315
    %v332 = vadd.f32 %v279, %v316
    %v333 = vadd.f32 %v280, %v317
    %v334 = vadd.f32 %v281, %v318
    %v335 = vadd.f32 %v282, %v319
    %v336 = vadd.f32 %v283, %v320
    %v337 = vadd.f32 %v284, %v321
    %v338 = vadd.f32 %v285, %v322
    %v339 = vadd.f32 %v286, %v323
    %v340 = vadd.f32 %v287, %v324
    %v341 = vadd.f32 %v288, %v325
    %v342 = vadd.f32 %v289, %v326
    %v343 = vadd.f32 %v290, %v327
    %v344 = vadd.f32 %v291, %v328
    %v345 = vadd.f32 %v292, %v329
    %v346 = vadd.f32 %v293, %v330
    %v347 = vadd.f32 %v294, %v331
    %s348 = scalar_lea.vmem [#allocation2], 32
    %v349 = vld [vmem:[%s348] sm:$0xff]
    %v350 = vld [vmem:[%s348 + $0x8] sm:$0xff]
    %v351 = vld [vmem:[%s348 + $0x10] sm:$0xff]
    %v352 = vld [vmem:[%s348 + $0x18] sm:$0xff]
    %v353 = vld [vmem:[%s348 + $0x20] sm:$0xff]
    %v354 = vld [vmem:[%s348 + $0x28] sm:$0xff]
    %v355 = vld [vmem:[%s348 + $0x30] sm:$0xff]
    %v356 = vld [vmem:[%s348 + $0x38] sm:$0xff]
    %v357 = vld [vmem:[%s348 + $0x40] sm:$0xff]
    %v358 = vld [vmem:[%s348 + $0x48] sm:$0xff]
    %v359 = vld [vmem:[%s348 + $0x50] sm:$0xff]
    %v360 = vld [vmem:[%s348 + $0x58] sm:$0xff]
    %v361 = vld [vmem:[%s348 + $0x60] sm:$0xff]
    %v362 = vld [vmem:[%s348 + $0x68] sm:$0xff]
    %v363 = vld [vmem:[%s348 + $0x70] sm:$0xff]
    %v364 = vld [vmem:[%s348 + $0x78] sm:$0xff]
    %v365 = vlaneseq
    %v366 = vshrl.u32 %v365, 7
    %v367 = vsub.s32 4, %v366
    %v368 = vrot.slane %v130, %v367
    %v369 = vmul.f32 %v349, %v368
    %v370 = vmul.f32 %v350, %v368
    %v371 = vmul.f32 %v351, %v368
    %v372 = vmul.f32 %v352, %v368
    %v373 = vmul.f32 %v353, %v368
    %v374 = vmul.f32 %v354, %v368
    %v375 = vmul.f32 %v355, %v368
    %v376 = vmul.f32 %v356, %v368
    %v377 = vmul.f32 %v357, %v368
    %v378 = vmul.f32 %v358, %v368
    %v379 = vmul.f32 %v359, %v368
    %v380 = vmul.f32 %v360, %v368
    %v381 = vmul.f32 %v361, %v368
    %v382 = vmul.f32 %v362, %v368
    %v383 = vmul.f32 %v363, %v368
    %v384 = vmul.f32 %v364, %v368
    %v385 = vadd.f32 %v332, %v369
    %v386 = vadd.f32 %v333, %v370
    %v387 = vadd.f32 %v334, %v371
    %v388 = vadd.f32 %v335, %v372
    %v389 = vadd.f32 %v336, %v373
    %v390 = vadd.f32 %v337, %v374
    %v391 = vadd.f32 %v338, %v375
    %v392 = vadd.f32 %v339, %v376
    %v393 = vadd.f32 %v340, %v377
    %v394 = vadd.f32 %v341, %v378
    %v395 = vadd.f32 %v342, %v379
    %v396 = vadd.f32 %v343, %v380
    %v397 = vadd.f32 %v344, %v381
    %v398 = vadd.f32 %v345, %v382
    %v399 = vadd.f32 %v346, %v383
    %v400 = vadd.f32 %v347, %v384
    %401 = vmatprep.subr.mxu0 0.0
    %402 = vmatpush1.msra.mxu0 %v131
    %403 = vmatprep.subr.mxu0 0.0
    %404 = vmatpush1.msra.mxu0 %v132
    %405 = vmatprep.subr.mxu0 0.0
    %406 = vmatpush1.msra.mxu0 %v133
    %407 = vmatprep.subr.mxu0 0.0
    %408 = vmatpush1.msra.mxu0 %v134
    %409 = vmatprep.subr.mxu0 0.0
    %410 = vmatpush1.msra.mxu0 %v135
    %411 = vmatprep.subr.mxu0 0.0
    %412 = vmatpush1.msra.mxu0 %v136
    %413 = vmatprep.subr.mxu0 0.0
    %414 = vmatpush1.msra.mxu0 %v137
    %415 = vmatprep.subr.mxu0 0.0
    %416 = vmatpush1.msra.mxu0 %v138
    %417 = vmatprep.subr.mxu0 0.0
    %418 = vmatpush1.msra.mxu0 %v139
    %419 = vmatprep.subr.mxu0 0.0
    %420 = vmatpush1.msra.mxu0 %v140
    %421 = vmatprep.subr.mxu0 0.0
    %422 = vmatpush1.msra.mxu0 %v141
    %423 = vmatprep.subr.mxu0 0.0
    %424 = vmatpush1.msra.mxu0 %v142
    %425 = vmatprep.subr.mxu0 0.0
    %426 = vmatpush1.msra.mxu0 %v143
    %427 = vmatprep.subr.mxu0 0.0
    %428 = vmatpush1.msra.mxu0 %v144
    %429 = vmatprep.subr.mxu0 0.0
    %430 = vmatpush1.msra.mxu0 %v145
    %431 = vmatprep.subr.mxu0 0.0
    %432 = vmatpush1.msra.mxu0 %v146
    %433 = vmatprep.subr.mxu0 0.0
    %434 = vmatpush1.msra.mxu0 0.0
    %435 = vmatprep.subr.mxu0 0.0
    %436 = vmatpush1.msra.mxu0 0.0
    %437 = vmatprep.subr.mxu0 0.0
    %438 = vmatpush1.msra.mxu0 0.0
    %439 = vmatprep.subr.mxu0 0.0
    %440 = vmatpush1.msra.mxu0 0.0
    %441 = vmatprep.subr.mxu0 0.0
    %442 = vmatpush1.msra.mxu0 0.0
    %443 = vmatprep.subr.mxu0 0.0
    %444 = vmatpush1.msra.mxu0 0.0
    %445 = vmatprep.subr.mxu0 0.0
    %446 = vmatpush1.msra.mxu0 0.0
    %447 = vmatprep.subr.mxu0 0.0
    %448 = vmatpush1.msra.mxu0 0.0
    %449 = vmatprep.subr.mxu0 0.0
    %450 = vmatpush1.msra.mxu0 0.0
    %451 = vmatprep.subr.mxu0 0.0
    %452 = vmatpush1.msra.mxu0 0.0
    %453 = vmatprep.subr.mxu0 0.0
    %454 = vmatpush1.msra.mxu0 0.0
    %455 = vmatprep.subr.mxu0 0.0
    %456 = vmatpush1.msra.mxu0 0.0
    %457 = vmatprep.subr.mxu0 0.0
    %458 = vmatpush1.msra.mxu0 0.0
    %459 = vmatprep.subr.mxu0 0.0
    %460 = vmatpush1.msra.mxu0 0.0
    %461 = vmatprep.subr.mxu0 0.0
    %462 = vmatpush1.msra.mxu0 0.0
    %463 = vmatprep.subr.mxu0 0.0
    %464 = vmatpush1.msra.mxu0 0.0
    %465 = vmatprep.mubr.f32.mxu0 0.0
    %466 = vmatmul.mubr.f32.gmra.mrb[0].mxu0 %v385
    %v467 = vpop.f32.mrb[0].mxu0
    %v468 = vadd.f32 0.0, %v467
    %v469 = vpop.f32.mrb[0].mxu0
    %470 = vmatprep.mubr.f32.mxu0 0.0
    %471 = vmatmul.mubr.f32.gmra.mrb[0].mxu0 %v386
    %v472 = vpop.f32.mrb[0].mxu0
    %v473 = vadd.f32 0.0, %v472
    %v474 = vpop.f32.mrb[0].mxu0
    %475 = vmatprep.mubr.f32.mxu0 0.0
    %476 = vmatmul.mubr.f32.gmra.mrb[0].mxu0 %v387
    %v477 = vpop.f32.mrb[0].mxu0
    %v478 = vadd.f32 0.0, %v477
    %v479 = vpop.f32.mrb[0].mxu0
    %480 = vmatprep.mubr.f32.mxu0 0.0
    %481 = vmatmul.mubr.f32.gmra.mrb[0].mxu0 %v388
    %v482 = vpop.f32.mrb[0].mxu0
    %v483 = vadd.f32 0.0, %v482
    %v484 = vpop.f32.mrb[0].mxu0
    %485 = vmatprep.mubr.f32.mxu0 0.0
    %486 = vmatmul.mubr.f32.gmra.mrb[0].mxu0 %v389
    %v487 = vpop.f32.mrb[0].mxu0
    %v488 = vadd.f32 0.0, %v487
    %v489 = vpop.f32.mrb[0].mxu0
    %490 = vmatprep.mubr.f32.mxu0 0.0
    %491 = vmatmul.mubr.f32.gmra.mrb[0].mxu0 %v390
    %v492 = vpop.f32.mrb[0].mxu0
    %v493 = vadd.f32 0.0, %v492
    %v494 = vpop.f32.mrb[0].mxu0
    %495 = vmatprep.mubr.f32.mxu0 0.0
    %496 = vmatmul.mubr.f32.gmra.mrb[0].mxu0 %v391
    %v497 = vpop.f32.mrb[0].mxu0
    %v498 = vadd.f32 0.0, %v497
    %v499 = vpop.f32.mrb[0].mxu0
    %500 = vmatprep.mubr.f32.mxu0 0.0
    %501 = vmatmul.mubr.f32.gmra.mrb[0].mxu0 %v392
    %v502 = vpop.f32.mrb[0].mxu0
    %v503 = vadd.f32 0.0, %v502
    %v504 = vpop.f32.mrb[0].mxu0
    %505 = vmatprep.mubr.f32.mxu0 0.0
    %506 = vmatmul.mubr.f32.gmra.mrb[0].mxu0 %v393
    %v507 = vpop.f32.mrb[0].mxu0
    %v508 = vadd.f32 0.0, %v507
    %v509 = vpop.f32.mrb[0].mxu0
    %510 = vmatprep.mubr.f32.mxu0 0.0
    %511 = vmatmul.mubr.f32.gmra.mrb[0].mxu0 %v394
    %v512 = vpop.f32.mrb[0].mxu0
    %v513 = vadd.f32 0.0, %v512
    %v514 = vpop.f32.mrb[0].mxu0
    %515 = vmatprep.mubr.f32.mxu0 0.0
    %516 = vmatmul.mubr.f32.gmra.mrb[0].mxu0 %v395
    %v517 = vpop.f32.mrb[0].mxu0
    %v518 = vadd.f32 0.0, %v517
    %v519 = vpop.f32.mrb[0].mxu0
    %520 = vmatprep.mubr.f32.mxu0 0.0
    %521 = vmatmul.mubr.f32.gmra.mrb[0].mxu0 %v396
    %v522 = vpop.f32.mrb[0].mxu0
    %v523 = vadd.f32 0.0, %v522
    %v524 = vpop.f32.mrb[0].mxu0
    %525 = vmatprep.mubr.f32.mxu0 0.0
    %526 = vmatmul.mubr.f32.gmra.mrb[0].mxu0 %v397
    %v527 = vpop.f32.mrb[0].mxu0
    %v528 = vadd.f32 0.0, %v527
    %v529 = vpop.f32.mrb[0].mxu0
    %530 = vmatprep.mubr.f32.mxu0 0.0
    %531 = vmatmul.mubr.f32.gmra.mrb[0].mxu0 %v398
    %v532 = vpop.f32.mrb[0].mxu0
    %v533 = vadd.f32 0.0, %v532
    %v534 = vpop.f32.mrb[0].mxu0
    %535 = vmatprep.mubr.f32.mxu0 0.0
    %536 = vmatmul.mubr.f32.gmra.mrb[0].mxu0 %v399
    %v537 = vpop.f32.mrb[0].mxu0
    %v538 = vadd.f32 0.0, %v537
    %v539 = vpop.f32.mrb[0].mxu0
    %540 = vmatprep.mubr.f32.mxu0 0.0
    %541 = vmatmul.mubr.f32.gmra.mrb[0].mxu0 %v400
    %v542 = vpop.f32.mrb[0].mxu0
    %v543 = vadd.f32 0.0, %v542
    %v544 = vpop.f32.mrb[0].mxu0
    %545 = vdwg.mxu0
    %v547 = vlaneseq
    %v548 = vshrl.u32 %v547, 7
    %v549 = vsub.s32 0, %v548
    %v550 = vrot.slane %v147, %v549
    %v552 = vadd.f32 %v468, %v550
    %v553 = vadd.f32 %v473, %v550
    %v554 = vadd.f32 %v478, %v550
    %v555 = vadd.f32 %v483, %v550
    %v556 = vadd.f32 %v488, %v550
    %v557 = vadd.f32 %v493, %v550
    %v558 = vadd.f32 %v498, %v550
    %v559 = vadd.f32 %v503, %v550
    %v560 = vadd.f32 %v508, %v550
    %v561 = vadd.f32 %v513, %v550
    %v562 = vadd.f32 %v518, %v550
    %v563 = vadd.f32 %v523, %v550
    %v564 = vadd.f32 %v528, %v550
    %v565 = vadd.f32 %v533, %v550
    %v566 = vadd.f32 %v538, %v550
    %v567 = vadd.f32 %v543, %v550
    %v568 = vmul.f32 %v552, %v552
    %v569 = vmul.f32 %v553, %v553
    %v570 = vmul.f32 %v554, %v554
    %v571 = vmul.f32 %v555, %v555
    %v572 = vmul.f32 %v556, %v556
    %v573 = vmul.f32 %v557, %v557
    %v574 = vmul.f32 %v558, %v558
    %v575 = vmul.f32 %v559, %v559
    %v576 = vmul.f32 %v560, %v560
    %v577 = vmul.f32 %v561, %v561
    %v578 = vmul.f32 %v562, %v562
    %v579 = vmul.f32 %v563, %v563
    %v580 = vmul.f32 %v564, %v564
    %v581 = vmul.f32 %v565, %v565
    %v582 = vmul.f32 %v566, %v566
    %v583 = vmul.f32 %v567, %v567
    %v584 = vmul.f32 %v552, %v568
    %v585 = vmul.f32 %v553, %v569
    %v586 = vmul.f32 %v554, %v570
    %v587 = vmul.f32 %v555, %v571
    %v588 = vmul.f32 %v556, %v572
    %v589 = vmul.f32 %v557, %v573
    %v590 = vmul.f32 %v558, %v574
    %v591 = vmul.f32 %v559, %v575
    %v592 = vmul.f32 %v560, %v576
    %v593 = vmul.f32 %v561, %v577
    %v594 = vmul.f32 %v562, %v578
    %v595 = vmul.f32 %v563, %v579
    %v596 = vmul.f32 %v564, %v580
    %v597 = vmul.f32 %v565, %v581
    %v598 = vmul.f32 %v566, %v582
    %v599 = vmul.f32 %v567, %v583
    %v600 = vmul.f32 %v584, 0.044715
    %v601 = vmul.f32 %v585, 0.044715
    %v602 = vmul.f32 %v586, 0.044715
    %v603 = vmul.f32 %v587, 0.044715
    %v604 = vmul.f32 %v588, 0.044715
    %v605 = vmul.f32 %v589, 0.044715
    %v606 = vmul.f32 %v590, 0.044715
    %v607 = vmul.f32 %v591, 0.044715
    %v608 = vmul.f32 %v592, 0.044715
    %v609 = vmul.f32 %v593, 0.044715
    %v610 = vmul.f32 %v594, 0.044715
    %v611 = vmul.f32 %v595, 0.044715
    %v612 = vmul.f32 %v596, 0.044715
    %v613 = vmul.f32 %v597, 0.044715
    %v614 = vmul.f32 %v598, 0.044715
    %v615 = vmul.f32 %v599, 0.044715
    %v616 = vadd.f32 %v552, %v600
    %v617 = vadd.f32 %v553, %v601
    %v618 = vadd.f32 %v554, %v602
    %v619 = vadd.f32 %v555, %v603
    %v620 = vadd.f32 %v556, %v604
    %v621 = vadd.f32 %v557, %v605
    %v622 = vadd.f32 %v558, %v606
    %v623 = vadd.f32 %v559, %v607
    %v624 = vadd.f32 %v560, %v608
    %v625 = vadd.f32 %v561, %v609
    %v626 = vadd.f32 %v562, %v610
    %v627 = vadd.f32 %v563, %v611
    %v628 = vadd.f32 %v564, %v612
    %v629 = vadd.f32 %v565, %v613
    %v630 = vadd.f32 %v566, %v614
    %v631 = vadd.f32 %v567, %v615
    %v632 = vmul.f32 %v616, 0.7978846
    %v633 = vmul.f32 %v617, 0.7978846
    %v634 = vmul.f32 %v618, 0.7978846
    %v635 = vmul.f32 %v619, 0.7978846
    %v636 = vmul.f32 %v620, 0.7978846
    %v637 = vmul.f32 %v621, 0.7978846
    %v638 = vmul.f32 %v622, 0.7978846
    %v639 = vmul.f32 %v623, 0.7978846
    %v640 = vmul.f32 %v624, 0.7978846
    %v641 = vmul.f32 %v625, 0.7978846
    %v642 = vmul.f32 %v626, 0.7978846
    %v643 = vmul.f32 %v627, 0.7978846
    %v644 = vmul.f32 %v628, 0.7978846
    %v645 = vmul.f32 %v629, 0.7978846
    %v646 = vmul.f32 %v630, 0.7978846
    %v647 = vmul.f32 %v631, 0.7978846
    %v648 = vtanh.pop %v632
    %v649 = vtanh.pop %v633
    %v650 = vtanh.pop %v634
    %v651 = vtanh.pop %v635
    %v652 = vtanh.pop %v636
    %v653 = vtanh.pop %v637
    %v654 = vtanh.pop %v638
    %v655 = vtanh.pop %v639
    %v656 = vtanh.pop %v640
    %v657 = vtanh.pop %v641
    %v658 = vtanh.pop %v642
    %v659 = vtanh.pop %v643
    %v660 = vtanh.pop %v644
    %v661 = vtanh.pop %v645
    %v662 = vtanh.pop %v646
    %v663 = vtanh.pop %v647
    %v664 = vadd.f32 %v648, 1.0
    %v665 = vadd.f32 %v649, 1.0
    %v666 = vadd.f32 %v650, 1.0
    %v667 = vadd.f32 %v651, 1.0
    %v668 = vadd.f32 %v652, 1.0
    %v669 = vadd.f32 %v653, 1.0
    %v670 = vadd.f32 %v654, 1.0
    %v671 = vadd.f32 %v655, 1.0
    %v672 = vadd.f32 %v656, 1.0
    %v673 = vadd.f32 %v657, 1.0
    %v674 = vadd.f32 %v658, 1.0
    %v675 = vadd.f32 %v659, 1.0
    %v676 = vadd.f32 %v660, 1.0
    %v677 = vadd.f32 %v661, 1.0
    %v678 = vadd.f32 %v662, 1.0
    %v679 = vadd.f32 %v663, 1.0
    %v680 = vmul.f32 %v664, 0.5
    %v681 = vmul.f32 %v665, 0.5
    %v682 = vmul.f32 %v666, 0.5
    %v683 = vmul.f32 %v667, 0.5
    %v684 = vmul.f32 %v668, 0.5
    %v685 = vmul.f32 %v669, 0.5
    %v686 = vmul.f32 %v670, 0.5
    %v687 = vmul.f32 %v671, 0.5
    %v688 = vmul.f32 %v672, 0.5
    %v689 = vmul.f32 %v673, 0.5
    %v690 = vmul.f32 %v674, 0.5
    %v691 = vmul.f32 %v675, 0.5
    %v692 = vmul.f32 %v676, 0.5
    %v693 = vmul.f32 %v677, 0.5
    %v694 = vmul.f32 %v678, 0.5
    %v695 = vmul.f32 %v679, 0.5
    %v696 = vmul.f32 %v552, %v680
    %v697 = vmul.f32 %v553, %v681
    %v698 = vmul.f32 %v554, %v682
    %v699 = vmul.f32 %v555, %v683
    %v700 = vmul.f32 %v556, %v684
    %v701 = vmul.f32 %v557, %v685
    %v702 = vmul.f32 %v558, %v686
    %v703 = vmul.f32 %v559, %v687
    %v704 = vmul.f32 %v560, %v688
    %v705 = vmul.f32 %v561, %v689
    %v706 = vmul.f32 %v562, %v690
    %v707 = vmul.f32 %v563, %v691
    %v708 = vmul.f32 %v564, %v692
    %v709 = vmul.f32 %v565, %v693
    %v710 = vmul.f32 %v566, %v694
    %v711 = vmul.f32 %v567, %v695
    %v712 = vadd.f32 %v696, %v114
    %v713 = vadd.f32 %v697, %v115
    %v714 = vadd.f32 %v698, %v116
    %v715 = vadd.f32 %v699, %v117
    %v716 = vadd.f32 %v700, %v118
    %v717 = vadd.f32 %v701, %v119
    %v718 = vadd.f32 %v702, %v120
    %v719 = vadd.f32 %v703, %v121
    %v720 = vadd.f32 %v704, %v122
    %v721 = vadd.f32 %v705, %v123
    %v722 = vadd.f32 %v706, %v124
    %v723 = vadd.f32 %v707, %v125
    %v724 = vadd.f32 %v708, %v126
    %v725 = vadd.f32 %v709, %v127
    %v726 = vadd.f32 %v710, %v128
    %v727 = vadd.f32 %v711, %v129
    %v728 = vadd.f32 %v712, %v713
    %v729 = vadd.f32 %v714, %v715
    %v730 = vadd.f32 %v716, %v717
    %v731 = vadd.f32 %v718, %v719
    %v732 = vadd.f32 %v720, %v721
    %v733 = vadd.f32 %v722, %v723
    %v734 = vadd.f32 %v724, %v725
    %v735 = vadd.f32 %v726, %v727
    %v736 = vmul.f32 %v728, 0.5
    %v737 = vmul.f32 %v729, 0.5
    %v738 = vmul.f32 %v730, 0.5
    %v739 = vmul.f32 %v731, 0.5
    %v740 = vmul.f32 %v732, 0.5
    %v741 = vmul.f32 %v733, 0.5
    %v742 = vmul.f32 %v734, 0.5
    %v743 = vmul.f32 %v735, 0.5
    %v744 = vld [vmem:[#allocation11] sm:$0x1f]
    %v745 = vld [vmem:[#allocation12] sm:$0xff]
    %v746 = vld [vmem:[#allocation12 + $0x8] sm:$0xff]
    %v747 = vld [vmem:[#allocation12 + $0x10] sm:$0xff]
    %v748 = vld [vmem:[#allocation12 + $0x18] sm:$0xff]
    %v749 = vld [vmem:[#allocation12 + $0x20] sm:$0xff]
    %v750 = vld [vmem:[#allocation12 + $0x28] sm:$0xff]
    %v751 = vld [vmem:[#allocation12 + $0x30] sm:$0xff]
    %v752 = vld [vmem:[#allocation12 + $0x38] sm:$0xff]
    %v753 = vld [vmem:[#allocation12 + $0x40] sm:$0xff]
    %v754 = vld [vmem:[#allocation12 + $0x48] sm:$0xff]
    %v755 = vld [vmem:[#allocation12 + $0x50] sm:$0xff]
    %v756 = vld [vmem:[#allocation12 + $0x58] sm:$0xff]
    %v757 = vld [vmem:[#allocation12 + $0x60] sm:$0xff]
    %v758 = vld [vmem:[#allocation12 + $0x68] sm:$0xff]
    %v759 = vld [vmem:[#allocation12 + $0x70] sm:$0xff]
    %v760 = vld [vmem:[#allocation12 + $0x78] sm:$0xff]
    %v761 = vld [vmem:[#allocation14] sm:$0x1]
    %762 = vst [vmem:[#allocation2] sm:$0xff] 0.0
    %763 = vst [vmem:[#allocation2 + $0x8] sm:$0xff] 0.0
    %s764 = scalar_lea.vmem [#allocation2], 80
    %765 = vst [vmem:[%s764] sm:$0xff] 0.0
    %766 = vst [vmem:[%s764 + $0x8] sm:$0xff] 0.0
    %767 = vst [vmem:[%s153] sm:$0xff] %v736
    %768 = vst [vmem:[%s153 + $0x8] sm:$0xff] %v737
    %769 = vst [vmem:[%s153 + $0x10] sm:$0xff] %v738
    %770 = vst [vmem:[%s153 + $0x18] sm:$0xff] %v739
    %771 = vst [vmem:[%s153 + $0x20] sm:$0xff] %v740
    %772 = vst [vmem:[%s153 + $0x28] sm:$0xff] %v741
    %773 = vst [vmem:[%s153 + $0x30] sm:$0xff] %v742
    %774 = vst [vmem:[%s153 + $0x38] sm:$0xff] %v743
    %v775 = vlaneseq
    %v776 = vshrl.u32 %v775, 7
    %v777 = vsub.s32 2, %v776
    %v778 = vrot.slane %v744, %v777
    %v779 = vmul.f32 %v736, %v778
    %v780 = vmul.f32 %v737, %v778
    %v781 = vmul.f32 %v738, %v778
    %v782 = vmul.f32 %v739, %v778
    %v783 = vmul.f32 %v740, %v778
    %v784 = vmul.f32 %v741, %v778
    %v785 = vmul.f32 %v742, %v778
    %v786 = vmul.f32 %v743, %v778
    %v787 = vld [vmem:[#allocation2] sm:$0xff]
    %v788 = vld [vmem:[#allocation2 + $0x8] sm:$0xff]
    %v789 = vld [vmem:[#allocation2 + $0x10] sm:$0xff]
    %v790 = vld [vmem:[#allocation2 + $0x18] sm:$0xff]
    %v791 = vld [vmem:[#allocation2 + $0x20] sm:$0xff]
    %v792 = vld [vmem:[#allocation2 + $0x28] sm:$0xff]
    %v793 = vld [vmem:[#allocation2 + $0x30] sm:$0xff]
    %v794 = vld [vmem:[#allocation2 + $0x38] sm:$0xff]
    %v795 = vlaneseq
    %v796 = vshrl.u32 %v795, 7
    %v797 = vsub.s32 0, %v796
    %v798 = vrot.slane %v744, %v797
    %v799 = vmul.f32 %v787, %v798
    %v800 = vmul.f32 %v788, %v798
    %v801 = vmul.f32 %v789, %v798
    %v802 = vmul.f32 %v790, %v798
    %v803 = vmul.f32 %v791, %v798
    %v804 = vmul.f32 %v792, %v798
    %v805 = vmul.f32 %v793, %v798
    %v806 = vmul.f32 %v794, %v798
    %v807 = vadd.f32 %v779, %v799
    %v808 = vadd.f32 %v780, %v800
    %v809 = vadd.f32 %v781, %v801
    %v810 = vadd.f32 %v782, %v802
    %v811 = vadd.f32 %v783, %v803
    %v812 = vadd.f32 %v784, %v804
    %v813 = vadd.f32 %v785, %v805
    %v814 = vadd.f32 %v786, %v806
    %v815 = vld [vmem:[%s242] sm:$0xff]
    %v816 = vld [vmem:[%s242 + $0x8] sm:$0xff]
    %v817 = vld [vmem:[%s242 + $0x10] sm:$0xff]
    %v818 = vld [vmem:[%s242 + $0x18] sm:$0xff]
    %v819 = vld [vmem:[%s242 + $0x20] sm:$0xff]
    %v820 = vld [vmem:[%s242 + $0x28] sm:$0xff]
    %v821 = vld [vmem:[%s242 + $0x30] sm:$0xff]
    %v822 = vld [vmem:[%s242 + $0x38] sm:$0xff]
    %v823 = vlaneseq
    %v824 = vshrl.u32 %v823, 7
    %v825 = vsub.s32 1, %v824
    %v826 = vrot.slane %v744, %v825
    %v827 = vmul.f32 %v815, %v826
    %v828 = vmul.f32 %v816, %v826
    %v829 = vmul.f32 %v817, %v826
    %v830 = vmul.f32 %v818, %v826
    %v831 = vmul.f32 %v819, %v826
    %v832 = vmul.f32 %v820, %v826
    %v833 = vmul.f32 %v821, %v826
    %v834 = vmul.f32 %v822, %v826
    %v835 = vadd.f32 %v807, %v827
    %v836 = vadd.f32 %v808, %v828
    %v837 = vadd.f32 %v809, %v829
    %v838 = vadd.f32 %v810, %v830
    %v839 = vadd.f32 %v811, %v831
    %v840 = vadd.f32 %v812, %v832
    %v841 = vadd.f32 %v813, %v833
    %v842 = vadd.f32 %v814, %v834
    %v843 = vld [vmem:[%s295] sm:$0xff]
    %v844 = vld [vmem:[%s295 + $0x8] sm:$0xff]
    %v845 = vld [vmem:[%s295 + $0x10] sm:$0xff]
    %v846 = vld [vmem:[%s295 + $0x18] sm:$0xff]
    %v847 = vld [vmem:[%s295 + $0x20] sm:$0xff]
    %v848 = vld [vmem:[%s295 + $0x28] sm:$0xff]
    %v849 = vld [vmem:[%s295 + $0x30] sm:$0xff]
    %v850 = vld [vmem:[%s295 + $0x38] sm:$0xff]
    %v851 = vlaneseq
    %v852 = vshrl.u32 %v851, 7
    %v853 = vsub.s32 3, %v852
    %v854 = vrot.slane %v744, %v853
    %v855 = vmul.f32 %v843, %v854
    %v856 = vmul.f32 %v844, %v854
    %v857 = vmul.f32 %v845, %v854
    %v858 = vmul.f32 %v846, %v854
    %v859 = vmul.f32 %v847, %v854
    %v860 = vmul.f32 %v848, %v854
    %v861 = vmul.f32 %v849, %v854
    %v862 = vmul.f32 %v850, %v854
    %v863 = vadd.f32 %v835, %v855
    %v864 = vadd.f32 %v836, %v856
    %v865 = vadd.f32 %v837, %v857
    %v866 = vadd.f32 %v838, %v858
    %v867 = vadd.f32 %v839, %v859
    %v868 = vadd.f32 %v840, %v860
    %v869 = vadd.f32 %v841, %v861
    %v870 = vadd.f32 %v842, %v862
    %v871 = vld [vmem:[%s348] sm:$0xff]
    %v872 = vld [vmem:[%s348 + $0x8] sm:$0xff]
    %v873 = vld [vmem:[%s348 + $0x10] sm:$0xff]
    %v874 = vld [vmem:[%s348 + $0x18] sm:$0xff]
    %v875 = vld [vmem:[%s348 + $0x20] sm:$0xff]
    %v876 = vld [vmem:[%s348 + $0x28] sm:$0xff]
    %v877 = vld [vmem:[%s348 + $0x30] sm:$0xff]
    %v878 = vld [vmem:[%s348 + $0x38] sm:$0xff]
    %v879 = vlaneseq
    %v880 = vshrl.u32 %v879, 7
    %v881 = vsub.s32 4, %v880
    %v882 = vrot.slane %v744, %v881
    %v883 = vmul.f32 %v871, %v882
    %v884 = vmul.f32 %v872, %v882
    %v885 = vmul.f32 %v873, %v882
    %v886 = vmul.f32 %v874, %v882
    %v887 = vmul.f32 %v875, %v882
    %v888 = vmul.f32 %v876, %v882
    %v889 = vmul.f32 %v877, %v882
    %v890 = vmul.f32 %v878, %v882
    %v891 = vadd.f32 %v863, %v883
    %v892 = vadd.f32 %v864, %v884
    %v893 = vadd.f32 %v865, %v885
    %v894 = vadd.f32 %v866, %v886
    %v895 = vadd.f32 %v867, %v887
    %v896 = vadd.f32 %v868, %v888
    %v897 = vadd.f32 %v869, %v889
    %v898 = vadd.f32 %v870, %v890
    %899 = vmatprep.subr.mxu0 0.0
    %900 = vmatpush1.msra.mxu0 %v745
    %901 = vmatprep.subr.mxu0 0.0
    %902 = vmatpush1.msra.mxu0 %v746
    %903 = vmatprep.subr.mxu0 0.0
    %904 = vmatpush1.msra.mxu0 %v747
    %905 = vmatprep.subr.mxu0 0.0
    %906 = vmatpush1.msra.mxu0 %v748
    %907 = vmatprep.subr.mxu0 0.0
    %908 = vmatpush1.msra.mxu0 %v749
    %909 = vmatprep.subr.mxu0 0.0
    %910 = vmatpush1.msra.mxu0 %v750
    %911 = vmatprep.subr.mxu0 0.0
    %912 = vmatpush1.msra.mxu0 %v751
    %913 = vmatprep.subr.mxu0 0.0
    %914 = vmatpush1.msra.mxu0 %v752
    %915 = vmatprep.subr.mxu0 0.0
    %916 = vmatpush1.msra.mxu0 %v753
    %917 = vmatprep.subr.mxu0 0.0
    %918 = vmatpush1.msra.mxu0 %v754
    %919 = vmatprep.subr.mxu0 0.0
    %920 = vmatpush1.msra.mxu0 %v755
    %921 = vmatprep.subr.mxu0 0.0
    %922 = vmatpush1.msra.mxu0 %v756
    %923 = vmatprep.subr.mxu0 0.0
    %924 = vmatpush1.msra.mxu0 %v757
    %925 = vmatprep.subr.mxu0 0.0
    %926 = vmatpush1.msra.mxu0 %v758
    %927 = vmatprep.subr.mxu0 0.0
    %928 = vmatpush1.msra.mxu0 %v759
    %929 = vmatprep.subr.mxu0 0.0
    %930 = vmatpush1.msra.mxu0 %v760
    %931 = vmatprep.subr.mxu0 0.0
    %932 = vmatpush1.msra.mxu0 0.0
    %933 = vmatprep.subr.mxu0 0.0
    %934 = vmatpush1.msra.mxu0 0.0
    %935 = vmatprep.subr.mxu0 0.0
    %936 = vmatpush1.msra.mxu0 0.0
    %937 = vmatprep.subr.mxu0 0.0
    %938 = vmatpush1.msra.mxu0 0.0
    %939 = vmatprep.subr.mxu0 0.0
    %940 = vmatpush1.msra.mxu0 0.0
    %941 = vmatprep.subr.mxu0 0.0
    %942 = vmatpush1.msra.mxu0 0.0
    %943 = vmatprep.subr.mxu0 0.0
    %944 = vmatpush1.msra.mxu0 0.0
    %945 = vmatprep.subr.mxu0 0.0
    %946 = vmatpush1.msra.mxu0 0.0
    %947 = vmatprep.subr.mxu0 0.0
    %948 = vmatpush1.msra.mxu0 0.0
    %949 = vmatprep.subr.mxu0 0.0
    %950 = vmatpush1.msra.mxu0 0.0
    %951 = vmatprep.subr.mxu0 0.0
    %952 = vmatpush1.msra.mxu0 0.0
    %953 = vmatprep.subr.mxu0 0.0
    %954 = vmatpush1.msra.mxu0 0.0
    %955 = vmatprep.subr.mxu0 0.0
    %956 = vmatpush1.msra.mxu0 0.0
    %957 = vmatprep.subr.mxu0 0.0
    %958 = vmatpush1.msra.mxu0 0.0
    %959 = vmatprep.subr.mxu0 0.0
    %960 = vmatpush1.msra.mxu0 0.0
    %961 = vmatprep.subr.mxu0 0.0
    %962 = vmatpush1.msra.mxu0 0.0
    %963 = vmatprep.mubr.f32.mxu0 0.0
    %964 = vmatmul.mubr.f32.gmra.mrb[0].mxu0 %v891
    %v965 = vpop.f32.mrb[0].mxu0
    %v966 = vadd.f32 0.0, %v965
    %v967 = vpop.f32.mrb[0].mxu0
    %968 = vmatprep.mubr.f32.mxu0 0.0
    %969 = vmatmul.mubr.f32.gmra.mrb[0].mxu0 %v892
    %v970 = vpop.f32.mrb[0].mxu0
    %v971 = vadd.f32 0.0, %v970
    %v972 = vpop.f32.mrb[0].mxu0
    %973 = vmatprep.mubr.f32.mxu0 0.0
    %974 = vmatmul.mubr.f32.gmra.mrb[0].mxu0 %v893
    %v975 = vpop.f32.mrb[0].mxu0
    %v976 = vadd.f32 0.0, %v975
    %v977 = vpop.f32.mrb[0].mxu0
    %978 = vmatprep.mubr.f32.mxu0 0.0
    %979 = vmatmul.mubr.f32.gmra.mrb[0].mxu0 %v894
    %v980 = vpop.f32.mrb[0].mxu0
    %v981 = vadd.f32 0.0, %v980
    %v982 = vpop.f32.mrb[0].mxu0
    %983 = vmatprep.mubr.f32.mxu0 0.0
    %984 = vmatmul.mubr.f32.gmra.mrb[0].mxu0 %v895
    %v985 = vpop.f32.mrb[0].mxu0
    %v986 = vadd.f32 0.0, %v985
    %v987 = vpop.f32.mrb[0].mxu0
    %988 = vmatprep.mubr.f32.mxu0 0.0
    %989 = vmatmul.mubr.f32.gmra.mrb[0].mxu0 %v896
    %v990 = vpop.f32.mrb[0].mxu0
    %v991 = vadd.f32 0.0, %v990
    %v992 = vpop.f32.mrb[0].mxu0
    %993 = vmatprep.mubr.f32.mxu0 0.0
    %994 = vmatmul.mubr.f32.gmra.mrb[0].mxu0 %v897
    %v995 = vpop.f32.mrb[0].mxu0
    %v996 = vadd.f32 0.0, %v995
    %v997 = vpop.f32.mrb[0].mxu0
    %998 = vmatprep.mubr.f32.mxu0 0.0
    %999 = vmatmul.mubr.f32.gmra.mrb[0].mxu0 %v898
    %v1000 = vpop.f32.mrb[0].mxu0
    %v1001 = vadd.f32 0.0, %v1000
    %v1002 = vpop.f32.mrb[0].mxu0
    %1003 = vdwg.mxu0
    %v1005 = vlaneseq
    %v1006 = vshrl.u32 %v1005, 7
    %v1007 = vsub.s32 0, %v1006
    %v1008 = vrot.slane %v761, %v1007
    %v1010 = vadd.f32 %v966, %v1008
    %v1011 = vadd.f32 %v971, %v1008
    %v1012 = vadd.f32 %v976, %v1008
    %v1013 = vadd.f32 %v981, %v1008
    %v1014 = vadd.f32 %v986, %v1008
    %v1015 = vadd.f32 %v991, %v1008
    %v1016 = vadd.f32 %v996, %v1008
    %v1017 = vadd.f32 %v1001, %v1008
    %v1018 = vmul.f32 %v1010, %v1010
    %v1019 = vmul.f32 %v1011, %v1011
    %v1020 = vmul.f32 %v1012, %v1012
    %v1021 = vmul.f32 %v1013, %v1013
    %v1022 = vmul.f32 %v1014, %v1014
    %v1023 = vmul.f32 %v1015, %v1015
    %v1024 = vmul.f32 %v1016, %v1016
    %v1025 = vmul.f32 %v1017, %v1017
    %v1026 = vmul.f32 %v1010, %v1018
    %v1027 = vmul.f32 %v1011, %v1019
    %v1028 = vmul.f32 %v1012, %v1020
    %v1029 = vmul.f32 %v1013, %v1021
    %v1030 = vmul.f32 %v1014, %v1022
    %v1031 = vmul.f32 %v1015, %v1023
    %v1032 = vmul.f32 %v1016, %v1024
    %v1033 = vmul.f32 %v1017, %v1025
    %v1034 = vmul.f32 %v1026, 0.044715
    %v1035 = vmul.f32 %v1027, 0.044715
    %v1036 = vmul.f32 %v1028, 0.044715
    %v1037 = vmul.f32 %v1029, 0.044715
    %v1038 = vmul.f32 %v1030, 0.044715
    %v1039 = vmul.f32 %v1031, 0.044715
    %v1040 = vmul.f32 %v1032, 0.044715
    %v1041 = vmul.f32 %v1033, 0.044715
    %v1042 = vadd.f32 %v1010, %v1034
    %v1043 = vadd.f32 %v1011, %v1035
    %v1044 = vadd.f32 %v1012, %v1036
    %v1045 = vadd.f32 %v1013, %v1037
    %v1046 = vadd.f32 %v1014, %v1038
    %v1047 = vadd.f32 %v1015, %v1039
    %v1048 = vadd.f32 %v1016, %v1040
    %v1049 = vadd.f32 %v1017, %v1041
    %v1050 = vmul.f32 %v1042, 0.7978846
    %v1051 = vmul.f32 %v1043, 0.7978846
    %v1052 = vmul.f32 %v1044, 0.7978846
    %v1053 = vmul.f32 %v1045, 0.7978846
    %v1054 = vmul.f32 %v1046, 0.7978846
    %v1055 = vmul.f32 %v1047, 0.7978846
    %v1056 = vmul.f32 %v1048, 0.7978846
    %v1057 = vmul.f32 %v1049, 0.7978846
    %v1058 = vtanh.pop %v1050
    %v1059 = vtanh.pop %v1051
    %v1060 = vtanh.pop %v1052
    %v1061 = vtanh.pop %v1053
    %v1062 = vtanh.pop %v1054
    %v1063 = vtanh.pop %v1055
    %v1064 = vtanh.pop %v1056
    %v1065 = vtanh.pop %v1057
    %v1066 = vadd.f32 %v1058, 1.0
    %v1067 = vadd.f32 %v1059, 1.0
    %v1068 = vadd.f32 %v1060, 1.0
    %v1069 = vadd.f32 %v1061, 1.0
    %v1070 = vadd.f32 %v1062, 1.0
    %v1071 = vadd.f32 %v1063, 1.0
    %v1072 = vadd.f32 %v1064, 1.0
    %v1073 = vadd.f32 %v1065, 1.0
    %v1074 = vmul.f32 %v1066, 0.5
    %v1075 = vmul.f32 %v1067, 0.5
    %v1076 = vmul.f32 %v1068, 0.5
    %v1077 = vmul.f32 %v1069, 0.5
    %v1078 = vmul.f32 %v1070, 0.5
    %v1079 = vmul.f32 %v1071, 0.5
    %v1080 = vmul.f32 %v1072, 0.5
    %v1081 = vmul.f32 %v1073, 0.5
    %v1082 = vmul.f32 %v1010, %v1074
    %v1083 = vmul.f32 %v1011, %v1075
    %v1084 = vmul.f32 %v1012, %v1076
    %v1085 = vmul.f32 %v1013, %v1077
    %v1086 = vmul.f32 %v1014, %v1078
    %v1087 = vmul.f32 %v1015, %v1079
    %v1088 = vmul.f32 %v1016, %v1080
    %v1089 = vmul.f32 %v1017, %v1081
    %v1090 = vadd.f32 %v1082, %v736
    %v1091 = vadd.f32 %v1083, %v737
    %v1092 = vadd.f32 %v1084, %v738
    %v1093 = vadd.f32 %v1085, %v739
    %v1094 = vadd.f32 %v1086, %v740
    %v1095 = vadd.f32 %v1087, %v741
    %v1096 = vadd.f32 %v1088, %v742
    %v1097 = vadd.f32 %v1089, %v743
    %v1098 = vadd.f32 %v1090, %v1091
    %v1099 = vadd.f32 %v1092, %v1093
    %v1100 = vadd.f32 %v1094, %v1095
    %v1101 = vadd.f32 %v1096, %v1097
    %v1102 = vmul.f32 %v1098, 0.5
    %v1103 = vmul.f32 %v1099, 0.5
    %v1104 = vmul.f32 %v1100, 0.5
    %v1105 = vmul.f32 %v1101, 0.5
    %1106 = vst [vmem:[#allocation15] sm:$0xff] %v1102
    %1107 = vst [vmem:[#allocation15 + $0x8] sm:$0xff] %v1103
    %1108 = vst [vmem:[#allocation15 + $0x10] sm:$0xff] %v1104
    %1109 = vst [vmem:[#allocation15 + $0x18] sm:$0xff] %v1105
    // Predicated region
    $region58: #{tpu_custom_call.1} parent=1 // pred_check
      _
    $region59: #{tpu_custom_call.1} parent=1 // pred_check_branch
      %1111 = sbr.rel (0) target = $region61
    $region60: #{tpu_custom_call.1} parent=1 // pred_region
      %s1113 = ssub.s32 512, 512
      %1114 = vsyncadd [#allocation5], %s1113
      %s1115 = sshll.u32 [#allocation15], 4
      %s1116 = int_to_ptr.vmem [resolvable:$true] %s1115
      %1121 = dma.vmem_to_hbm [thread:$0]  %s1116, 512, %s7, [#allocation5], 128, 128, 8
    $region61: #{tpu_custom_call.1} parent=1 // pred_fallthru
      _
    // Predicated region
    $region62: #{tpu_custom_call.1} parent=1 // pred_check
      _
    $region63: #{tpu_custom_call.1} parent=1 // pred_check_branch
      %1123 = sbr.rel (0) target = $region65
    $region64: #{tpu_custom_call.1} parent=1 // pred_region
      %1124 = dma.done [#allocation5], 512
    $region65: #{tpu_custom_call.1} parent=1 // pred_fallthru
      _
    %1125 = vsyncpa [#allocation4], 1
    %1126 = vsyncpa [#allocation7], 1
    %1127 = vsyncpa [#allocation10], 1
    %1128 = vsyncpa [#allocation13], 1
    %1129 = vsyncpa [#allocation5], 1

</llo_original>
